<compile_context>
chip_gen: v5e
topology: v5e:2x2
jax: 0.10.0
libtpu: 0.0.40
codegen_flags: <defaults>
</compile_context>

<pallas_src>
import numpy as np
import jax
import jax.numpy as jnp
from jax.experimental import pallas as pl
from jax.experimental.pallas import tpu as pltpu


# ---------------------------------------------------------------------------
# Pallas kernel: fused [bilinear 2x upsample -> conv3x3+ReLU -> conv3x3+ReLU]
# for one image per grid step.  Row-packed lane layouts:
#   x_ref lane = w  * Cin  + ci   (original width W)
#   o_ref lane = w' * Cout + co   (upsampled width W2)
# ---------------------------------------------------------------------------
def _fused_upsample_conv2_kernel(x_ref, uwp_ref, uh3_ref, b1_ref, b2_ref,
                                 s2_ref, o_ref):
    f32 = jnp.float32

    # 2x bilinear upsample along W on packed lanes: (H, W*Cin) @ (W*Cin, W2*Cin)
    xw = jnp.dot(x_ref[0], uwp_ref[...], preferred_element_type=f32)

    # conv1 + ReLU.  uh3[ky] @ xw == rows [ky : ky+H2] of the H-zero-padded,
    # fully upsampled image (the H-upsample and the ky tap shifts are folded
    # into tiny matmuls); b1[ky] is the banded (kx, Cin->Cmid) weight slab.
    acc1 = jnp.dot(jnp.dot(uh3_ref[0], xw, preferred_element_type=f32),
                   b1_ref[0], preferred_element_type=f32)
    acc1 += jnp.dot(jnp.dot(uh3_ref[1], xw, preferred_element_type=f32),
                    b1_ref[1], preferred_element_type=f32)
    acc1 += jnp.dot(jnp.dot(uh3_ref[2], xw, preferred_element_type=f32),
                    b1_ref[2], preferred_element_type=f32)
    y1 = jnp.maximum(acc1, 0.0)                              # (H2, W2*Cmid)

    # conv2 + ReLU: center tap plus two row-shifted taps.  The shift matrices
    # supply the zero H-halo without a padded scratch or offset stores.
    acc2 = jnp.dot(y1, b2_ref[1], preferred_element_type=f32)
    acc2 += jnp.dot(jnp.dot(s2_ref[0], y1, preferred_element_type=f32),
                    b2_ref[0], preferred_element_type=f32)
    acc2 += jnp.dot(jnp.dot(s2_ref[1], y1, preferred_element_type=f32),
                    b2_ref[2], preferred_element_type=f32)
    o_ref[0] = jnp.maximum(acc2, 0.0).astype(o_ref.dtype)    # dense 512-lane store


# ---------------------------------------------------------------------------
# One-time (init-time) construction of all constant operands -- numpy, no jit.
# ---------------------------------------------------------------------------
def _bilinear2x_matrix(in_size):
    """U[(2*in_size), in_size]: 2x bilinear upsample, align_corners=False."""
    out_size = 2 * in_size
    u = np.zeros((out_size, in_size), np.float32)
    for o in range(out_size):
        src = (o + 0.5) * 0.5 - 0.5
        src = min(max(src, 0.0), float(in_size - 1))
        lo = int(np.floor(src))
        hi = min(lo + 1, in_size - 1)
        t = src - lo
        u[o, lo] += 1.0 - t
        u[o, hi] += t
    return u


def _banded_conv_slabs(w_oihw, width):
    """Per-ky slabs B[ky] of shape (width*Cin, width*Cout) such that, for
    H-zero-padded packed rows (lane = w*Cin + ci), the 3x3 / stride-1 / pad-1 /
    bias-free conv is   out[h] = sum_ky rows[h + ky - 1] @ B[ky].
    The W zero-padding is folded in by dropping out-of-range kx taps (they
    would multiply zeros anyway)."""
    w = np.asarray(w_oihw, np.float32)
    cout, cin = w.shape[0], w.shape[1]
    slabs = np.zeros((3, width * cin, width * cout), np.float32)
    for ky in range(3):
        for kx in range(3):
            tap = w[:, :, ky, kx].T                       # (Cin, Cout)
            for col in range(width):
                v = col + kx - 1
                if 0 <= v < width:
                    slabs[ky, v * cin:(v + 1) * cin,
                          col * cout:(col + 1) * cout] = tap
    return slabs


def _row_shift_matrices(n):
    """s[0] @ y -> rows shifted down by one (row 0 zero); s[1] @ y -> up by one."""
    s = np.zeros((2, n, n), np.float32)
    s[0, 1:, :-1] = np.eye(n - 1, dtype=np.float32)
    s[1, :-1, 1:] = np.eye(n - 1, dtype=np.float32)
    return s


def prepare_decoder_params(conv1_w, conv2_w, fc1_w, fc1_b, fc2_w, fc2_b,
                           in_shape):
    """Build all constant kernel operands once at init (outside jit)."""
    _, cin, h, w = in_shape
    h2, w2 = 2 * h, 2 * w

    uw = _bilinear2x_matrix(w)                                   # (W2, W)
    uwp = np.kron(uw.T, np.eye(cin, dtype=np.float32))           # (W*Cin, W2*Cin)

    uh = _bilinear2x_matrix(h)                                   # (H2, H)
    uh_pad = np.zeros((h2 + 2, h), np.float32)
    uh_pad[1:h2 + 1] = uh
    uh3 = np.stack([uh_pad[ky:ky + h2] for ky in range(3)])      # (3, H2, H)

    b1 = _banded_conv_slabs(conv1_w, w2)                         # (3, W2*Cin,  W2*Cmid)
    b2 = _banded_conv_slabs(conv2_w, w2)                         # (3, W2*Cmid, W2*Cout)
    s2 = _row_shift_matrices(h2)                                 # (2, H2, H2)

    return dict(uwp=jnp.asarray(uwp), uh3=jnp.asarray(uh3),
                b1=jnp.asarray(b1), b2=jnp.asarray(b2), s2=jnp.asarray(s2),
                fc1_w=fc1_w, fc1_b=fc1_b, fc2_w=fc2_w, fc2_b=fc2_b)


# ---------------------------------------------------------------------------
# Forward (jittable): layout glue + one pallas_call + tiny SE block.
# ---------------------------------------------------------------------------
def fused_upsample_convs(x_nchw, uwp, uh3, b1, b2, s2):
    n, cin, h, w = x_nchw.shape
    h2, w2 = 2 * h, 2 * w
    cout = b2.shape[2] // w2

    # NCHW -> packed rows (N, H, W*Cin), lane = w*Cin + ci.
    xr = jnp.transpose(x_nchw, (0, 2, 3, 1)).reshape(n, h, w * cin)

    out_rows = pl.pallas_call(
        _fused_upsample_conv2_kernel,
        out_shape=jax.ShapeDtypeStruct((n, h2, w2 * cout), x_nchw.dtype),
        grid_spec=pltpu.PrefetchScalarGridSpec(
            num_scalar_prefetch=0,
            grid=(n,),                                   # 2 parallel steps (v7x: 1 per TC)
            in_specs=[
                pl.BlockSpec((1, h, w * cin), lambda i: (i, 0, 0)),
                pl.BlockSpec(uwp.shape, lambda i: (0, 0)),        # grid-invariant
                pl.BlockSpec(uh3.shape, lambda i: (0, 0, 0)),     # grid-invariant
                pl.BlockSpec(b1.shape, lambda i: (0, 0, 0)),      # grid-invariant
                pl.BlockSpec(b2.shape, lambda i: (0, 0, 0)),      # grid-invariant
                pl.BlockSpec(s2.shape, lambda i: (0, 0, 0)),      # grid-invariant
            ],
            out_specs=pl.BlockSpec((1, h2, w2 * cout), lambda i: (i, 0, 0)),
        ),
        compiler_params=pltpu.CompilerParams(
            dimension_semantics=("parallel",),
            vmem_limit_bytes=32 * 1024 * 1024,           # ~4 MiB live; ample everywhere
        ),
    )(xr, uwp, uh3, b1, b2, s2)

    # (N, H2, W2*Cout) -> NCHW (module interface); un-merge folds into transpose.
    return jnp.transpose(out_rows.reshape(n, h2, w2, cout), (0, 3, 1, 2))


def se_block(x_nchw, fc1_w, fc1_b, fc2_w, fc2_b):
    # TODO(synk): SEBlock is referenced but not defined in the provided spec; a
    # standard squeeze-excitation (global avgpool -> FC(C->C/r) -> ReLU ->
    # FC(C/r->C) -> sigmoid -> channel scale) with reduction=16 is assumed.
    s = jnp.mean(x_nchw, axis=(2, 3))
    s = jnp.maximum(s @ fc1_w.T + fc1_b, 0.0)
    s = jax.nn.sigmoid(s @ fc2_w.T + fc2_b)
    return x_nchw * s[:, :, None, None]


def decoder_se_block_v3(x, params):
    """Upsample(2x, bilinear) -> ConvRelu -> ConvRelu -> SEBlock (fused kernel)."""
    y = fused_upsample_convs(x, params["uwp"], params["uh3"],
                             params["b1"], params["b2"], params["s2"])
    return se_block(y, params["fc1_w"], params["fc1_b"],
                    params["fc2_w"], params["fc2_b"])


# ---------------------------------------------------------------------------
# Pure-JAX reference (gather upsample + lax.conv) for correctness checking.
# ---------------------------------------------------------------------------
def upsample_bilinear_2x_ref(x_nchw):
    n, c, h, w = x_nchw.shape

    def lerp_indices(out_size, in_size):
        src = (jnp.arange(out_size, dtype=jnp.float32) + 0.5) * (in_size / out_size) - 0.5
        src = jnp.clip(src, 0.0, in_size - 1.0)
        lo = jnp.floor(src).astype(jnp.int32)
        hi = jnp.minimum(lo + 1, in_size - 1)
        t = src - lo.astype(jnp.float32)
        return lo, hi, t

    h0, h1, th = lerp_indices(2 * h, h)
    w0, w1, tw = lerp_indices(2 * w, w)
    xh = (x_nchw[:, :, h0, :] * (1.0 - th)[None, None, :, None]
          + x_nchw[:, :, h1, :] * th[None, None, :, None])
    return (xh[:, :, :, w0] * (1.0 - tw)[None, None, None, :]
            + xh[:, :, :, w1] * tw[None, None, None, :])


def _conv3x3_relu_ref(x, w):
    out = jax.lax.conv_general_dilated(
        x, w, window_strides=(1, 1), padding=((1, 1), (1, 1)),
        dimension_numbers=("NCHW", "OIHW", "NCHW"))
    return jnp.maximum(out, 0.0)


def decoder_se_block_v3_ref(x, conv1_w, conv2_w, fc1_w, fc1_b, fc2_w, fc2_b):
    x = upsample_bilinear_2x_ref(x)
    x = _conv3x3_relu_ref(x, conv1_w)
    x = _conv3x3_relu_ref(x, conv2_w)
    return se_block(x, fc1_w, fc1_b, fc2_w, fc2_b)


if __name__ == "__main__":
    key = jax.random.PRNGKey(0)
    kx, kw1, kw2, kf1, kf2 = jax.random.split(key, 5)

    # DecoderSEBlockV3(in_channels=4, middle_channels=8, out_channels=16)
    N, Cin, Cmid, Cout, H, W = 2, 4, 8, 16, 16, 16
    reduction = 16
    Cr = max(Cout // reduction, 1)

    x = jax.random.normal(kx, (N, Cin, H, W), dtype=jnp.float32)

    def conv_init(k, co, ci):
        bound = (1.0 / (ci * 9)) ** 0.5          # Kaiming-uniform-like, bias=False
        return jax.random.uniform(k, (co, ci, 3, 3), dtype=jnp.float32,
                                  minval=-bound, maxval=bound)

    conv1_w = conv_init(kw1, Cmid, Cin)
    conv2_w = conv_init(kw2, Cout, Cmid)
    bound1 = (1.0 / Cout) ** 0.5
    fc1_w = jax.random.uniform(kf1, (Cr, Cout), dtype=jnp.float32,
                               minval=-bound1, maxval=bound1)
    fc1_b = jnp.zeros((Cr,), jnp.float32)
    bound2 = (1.0 / Cr) ** 0.5
    fc2_w = jax.random.uniform(kf2, (Cout, Cr), dtype=jnp.float32,
                               minval=-bound2, maxval=bound2)
    fc2_b = jnp.zeros((Cout,), jnp.float32)

    # Build all constant kernel operands ONCE (outside jit).
    params = prepare_decoder_params(conv1_w, conv2_w, fc1_w, fc1_b,
                                    fc2_w, fc2_b, x.shape)

    fwd = jax.jit(decoder_se_block_v3)
    out = jax.block_until_ready(fwd(x, params))

    ref = decoder_se_block_v3_ref(x, conv1_w, conv2_w, fc1_w, fc1_b, fc2_w, fc2_b)
    assert out.shape == (N, Cout, 2 * H, 2 * W), out.shape
    assert jnp.allclose(out, ref, atol=1e-4, rtol=1e-4), float(jnp.abs(out - ref).max())
    print("KERNEL_OK")
</pallas_src>

<mosaic_0001>
module attributes {stable_mosaic.version = 11 : i64} {
  func.func @_fused_upsample_conv2_kernel(%arg0: i32, %arg1: memref<1x16x64xf32, #tpu.memory_space<vmem>>, %arg2: memref<64x128xf32, #tpu.memory_space<vmem>>, %arg3: memref<3x32x16xf32, #tpu.memory_space<vmem>>, %arg4: memref<3x128x256xf32, #tpu.memory_space<vmem>>, %arg5: memref<3x256x512xf32, #tpu.memory_space<vmem>>, %arg6: memref<2x32x32xf32, #tpu.memory_space<vmem>>, %arg7: memref<1x32x512xf32, #tpu.memory_space<vmem>>) attributes {dimension_semantics = [#tpu.dimension_semantics<parallel>], iteration_bounds = array<i64: 2>, scalar_prefetch = 0 : i64, scratch_operands = 0 : i64, tpu.core_type = #tpu.core_type<tc>, window_params = [{transform_indices = @transform_0, window_bounds = array<i64: 1, 16, 64>}, {pipeline_mode = #tpu.pipeline_mode<synchronous>, transform_indices = @transform_1, window_bounds = array<i64: 64, 128>}, {pipeline_mode = #tpu.pipeline_mode<synchronous>, transform_indices = @transform_2, window_bounds = array<i64: 3, 32, 16>}, {pipeline_mode = #tpu.pipeline_mode<synchronous>, transform_indices = @transform_3, window_bounds = array<i64: 3, 128, 256>}, {pipeline_mode = #tpu.pipeline_mode<synchronous>, transform_indices = @transform_4, window_bounds = array<i64: 3, 256, 512>}, {pipeline_mode = #tpu.pipeline_mode<synchronous>, transform_indices = @transform_5, window_bounds = array<i64: 2, 32, 32>}, {transform_indices = @transform_6, window_bounds = array<i64: 1, 32, 512>}]} {
    %c0 = arith.constant 0 : index
    %c0_0 = arith.constant 0 : index
    %c0_1 = arith.constant 0 : index
    %0 = vector.load %arg1[%c0, %c0_0, %c0_1] : memref<1x16x64xf32, #tpu.memory_space<vmem>>, vector<1x16x64xf32>
    %1 = vector.shape_cast %0 : vector<1x16x64xf32> to vector<16x64xf32>
    %c0_2 = arith.constant 0 : index
    %c0_3 = arith.constant 0 : index
    %2 = vector.load %arg2[%c0_2, %c0_3] : memref<64x128xf32, #tpu.memory_space<vmem>>, vector<64x128xf32>
    %cst = arith.constant dense<0.000000e+00> : vector<16x128xf32>
    %3 = tpu.matmul %1, %2, %cst {dimension_numbers = #tpu.dot_dimension_numbers<[1], [0], [0], [1], [0, 0, 1, 1], [], []>} : vector<16x64xf32>, vector<64x128xf32>, vector<16x128xf32> -> vector<16x128xf32>
    %c0_4 = arith.constant 0 : index
    %c0_5 = arith.constant 0 : index
    %c0_6 = arith.constant 0 : index
    %4 = vector.load %arg3[%c0_4, %c0_5, %c0_6] : memref<3x32x16xf32, #tpu.memory_space<vmem>>, vector<1x32x16xf32>
    %5 = vector.shape_cast %4 : vector<1x32x16xf32> to vector<32x16xf32>
    %cst_7 = arith.constant dense<0.000000e+00> : vector<32x128xf32>
    %6 = tpu.matmul %5, %3, %cst_7 {dimension_numbers = #tpu.dot_dimension_numbers<[1], [0], [0], [1], [0, 0, 1, 1], [], []>} : vector<32x16xf32>, vector<16x128xf32>, vector<32x128xf32> -> vector<32x128xf32>
    %c0_8 = arith.constant 0 : index
    %c0_9 = arith.constant 0 : index
    %c0_10 = arith.constant 0 : index
    %7 = vector.load %arg4[%c0_8, %c0_9, %c0_10] : memref<3x128x256xf32, #tpu.memory_space<vmem>>, vector<1x128x256xf32>
    %8 = vector.shape_cast %7 : vector<1x128x256xf32> to vector<128x256xf32>
    %cst_11 = arith.constant dense<0.000000e+00> : vector<32x256xf32>
    %9 = tpu.matmul %6, %8, %cst_11 {dimension_numbers = #tpu.dot_dimension_numbers<[1], [0], [0], [1], [0, 0, 1, 1], [], []>} : vector<32x128xf32>, vector<128x256xf32>, vector<32x256xf32> -> vector<32x256xf32>
    %c1 = arith.constant 1 : index
    %c0_12 = arith.constant 0 : index
    %c0_13 = arith.constant 0 : index
    %10 = vector.load %arg3[%c1, %c0_12, %c0_13] : memref<3x32x16xf32, #tpu.memory_space<vmem>>, vector<1x32x16xf32>
    %11 = vector.shape_cast %10 : vector<1x32x16xf32> to vector<32x16xf32>
    %cst_14 = arith.constant dense<0.000000e+00> : vector<32x128xf32>
    %12 = tpu.matmul %11, %3, %cst_14 {dimension_numbers = #tpu.dot_dimension_numbers<[1], [0], [0], [1], [0, 0, 1, 1], [], []>} : vector<32x16xf32>, vector<16x128xf32>, vector<32x128xf32> -> vector<32x128xf32>
    %c1_15 = arith.constant 1 : index
    %c0_16 = arith.constant 0 : index
    %c0_17 = arith.constant 0 : index
    %13 = vector.load %arg4[%c1_15, %c0_16, %c0_17] : memref<3x128x256xf32, #tpu.memory_space<vmem>>, vector<1x128x256xf32>
    %14 = vector.shape_cast %13 : vector<1x128x256xf32> to vector<128x256xf32>
    %cst_18 = arith.constant dense<0.000000e+00> : vector<32x256xf32>
    %15 = tpu.matmul %12, %14, %cst_18 {dimension_numbers = #tpu.dot_dimension_numbers<[1], [0], [0], [1], [0, 0, 1, 1], [], []>} : vector<32x128xf32>, vector<128x256xf32>, vector<32x256xf32> -> vector<32x256xf32>
    %16 = arith.addf %9, %15 : vector<32x256xf32>
    %c2 = arith.constant 2 : index
    %c0_19 = arith.constant 0 : index
    %c0_20 = arith.constant 0 : index
    %17 = vector.load %arg3[%c2, %c0_19, %c0_20] : memref<3x32x16xf32, #tpu.memory_space<vmem>>, vector<1x32x16xf32>
    %18 = vector.shape_cast %17 : vector<1x32x16xf32> to vector<32x16xf32>
    %cst_21 = arith.constant dense<0.000000e+00> : vector<32x128xf32>
    %19 = tpu.matmul %18, %3, %cst_21 {dimension_numbers = #tpu.dot_dimension_numbers<[1], [0], [0], [1], [0, 0, 1, 1], [], []>} : vector<32x16xf32>, vector<16x128xf32>, vector<32x128xf32> -> vector<32x128xf32>
    %c2_22 = arith.constant 2 : index
    %c0_23 = arith.constant 0 : index
    %c0_24 = arith.constant 0 : index
    %20 = vector.load %arg4[%c2_22, %c0_23, %c0_24] : memref<3x128x256xf32, #tpu.memory_space<vmem>>, vector<1x128x256xf32>
    %21 = vector.shape_cast %20 : vector<1x128x256xf32> to vector<128x256xf32>
    %cst_25 = arith.constant dense<0.000000e+00> : vector<32x256xf32>
    %22 = tpu.matmul %19, %21, %cst_25 {dimension_numbers = #tpu.dot_dimension_numbers<[1], [0], [0], [1], [0, 0, 1, 1], [], []>} : vector<32x128xf32>, vector<128x256xf32>, vector<32x256xf32> -> vector<32x256xf32>
    %23 = arith.addf %16, %22 : vector<32x256xf32>
    %cst_26 = arith.constant 0.000000e+00 : f32
    %24 = vector.broadcast %cst_26 : f32 to vector<32x256xf32>
    %25 = arith.maximumf %23, %24 : vector<32x256xf32>
    %c1_27 = arith.constant 1 : index
    %c0_28 = arith.constant 0 : index
    %c0_29 = arith.constant 0 : index
    %26 = vector.load %arg5[%c1_27, %c0_28, %c0_29] : memref<3x256x512xf32, #tpu.memory_space<vmem>>, vector<1x256x512xf32>
    %27 = vector.shape_cast %26 : vector<1x256x512xf32> to vector<256x512xf32>
    %cst_30 = arith.constant dense<0.000000e+00> : vector<32x512xf32>
    %28 = tpu.matmul %25, %27, %cst_30 {dimension_numbers = #tpu.dot_dimension_numbers<[1], [0], [0], [1], [0, 0, 1, 1], [], []>} : vector<32x256xf32>, vector<256x512xf32>, vector<32x512xf32> -> vector<32x512xf32>
    %c0_31 = arith.constant 0 : index
    %c0_32 = arith.constant 0 : index
    %c0_33 = arith.constant 0 : index
    %29 = vector.load %arg6[%c0_31, %c0_32, %c0_33] : memref<2x32x32xf32, #tpu.memory_space<vmem>>, vector<1x32x32xf32>
    %30 = vector.shape_cast %29 : vector<1x32x32xf32> to vector<32x32xf32>
    %cst_34 = arith.constant dense<0.000000e+00> : vector<32x256xf32>
    %31 = tpu.matmul %30, %25, %cst_34 {dimension_numbers = #tpu.dot_dimension_numbers<[1], [0], [0], [1], [0, 0, 1, 1], [], []>} : vector<32x32xf32>, vector<32x256xf32>, vector<32x256xf32> -> vector<32x256xf32>
    %c0_35 = arith.constant 0 : index
    %c0_36 = arith.constant 0 : index
    %c0_37 = arith.constant 0 : index
    %32 = vector.load %arg5[%c0_35, %c0_36, %c0_37] : memref<3x256x512xf32, #tpu.memory_space<vmem>>, vector<1x256x512xf32>
    %33 = vector.shape_cast %32 : vector<1x256x512xf32> to vector<256x512xf32>
    %cst_38 = arith.constant dense<0.000000e+00> : vector<32x512xf32>
    %34 = tpu.matmul %31, %33, %cst_38 {dimension_numbers = #tpu.dot_dimension_numbers<[1], [0], [0], [1], [0, 0, 1, 1], [], []>} : vector<32x256xf32>, vector<256x512xf32>, vector<32x512xf32> -> vector<32x512xf32>
    %35 = arith.addf %28, %34 : vector<32x512xf32>
    %c1_39 = arith.constant 1 : index
    %c0_40 = arith.constant 0 : index
    %c0_41 = arith.constant 0 : index
    %36 = vector.load %arg6[%c1_39, %c0_40, %c0_41] : memref<2x32x32xf32, #tpu.memory_space<vmem>>, vector<1x32x32xf32>
    %37 = vector.shape_cast %36 : vector<1x32x32xf32> to vector<32x32xf32>
    %cst_42 = arith.constant dense<0.000000e+00> : vector<32x256xf32>
    %38 = tpu.matmul %37, %25, %cst_42 {dimension_numbers = #tpu.dot_dimension_numbers<[1], [0], [0], [1], [0, 0, 1, 1], [], []>} : vector<32x32xf32>, vector<32x256xf32>, vector<32x256xf32> -> vector<32x256xf32>
    %c2_43 = arith.constant 2 : index
    %c0_44 = arith.constant 0 : index
    %c0_45 = arith.constant 0 : index
    %39 = vector.load %arg5[%c2_43, %c0_44, %c0_45] : memref<3x256x512xf32, #tpu.memory_space<vmem>>, vector<1x256x512xf32>
    %40 = vector.shape_cast %39 : vector<1x256x512xf32> to vector<256x512xf32>
    %cst_46 = arith.constant dense<0.000000e+00> : vector<32x512xf32>
    %41 = tpu.matmul %38, %40, %cst_46 {dimension_numbers = #tpu.dot_dimension_numbers<[1], [0], [0], [1], [0, 0, 1, 1], [], []>} : vector<32x256xf32>, vector<256x512xf32>, vector<32x512xf32> -> vector<32x512xf32>
    %42 = arith.addf %35, %41 : vector<32x512xf32>
    %cst_47 = arith.constant 0.000000e+00 : f32
    %43 = vector.broadcast %cst_47 : f32 to vector<32x512xf32>
    %44 = arith.maximumf %42, %43 : vector<32x512xf32>
    %c0_48 = arith.constant 0 : index
    %c0_49 = arith.constant 0 : index
    %c0_50 = arith.constant 0 : index
    %45 = vector.load %arg7[%c0_48, %c0_49, %c0_50] : memref<1x32x512xf32, #tpu.memory_space<vmem>>, vector<1x32x512xf32>
    %46 = vector.shape_cast %45 : vector<1x32x512xf32> to vector<32x512xf32>
    %47 = vector.shape_cast %44 : vector<32x512xf32> to vector<1x32x512xf32>
    tpu.vector_store %arg7[%c0_48, %c0_49, %c0_50], %47 {strides = array<i32>} : memref<1x32x512xf32, #tpu.memory_space<vmem>>, vector<1x32x512xf32>,
    return
  }
  func.func @transform_0(%arg0: i32) -> (i32, i32, i32) {
    %c0_i32 = arith.constant 0 : i32
    %c0_i32_0 = arith.constant 0 : i32
    %c0_i32_1 = arith.constant 0 : i32
    return %arg0, %c0_i32, %c0_i32_0 : i32, i32, i32
  }
  func.func @transform_1(%arg0: i32) -> (i32, i32) {
    %c0_i32 = arith.constant 0 : i32
    %c0_i32_0 = arith.constant 0 : i32
    %c0_i32_1 = arith.constant 0 : i32
    return %c0_i32, %c0_i32_0 : i32, i32
  }
  func.func @transform_2(%arg0: i32) -> (i32, i32, i32) {
    %c0_i32 = arith.constant 0 : i32
    %c0_i32_0 = arith.constant 0 : i32
    %c0_i32_1 = arith.constant 0 : i32
    %c0_i32_2 = arith.constant 0 : i32
    return %c0_i32, %c0_i32_0, %c0_i32_1 : i32, i32, i32
  }
  func.func @transform_3(%arg0: i32) -> (i32, i32, i32) {
    %c0_i32 = arith.constant 0 : i32
    %c0_i32_0 = arith.constant 0 : i32
    %c0_i32_1 = arith.constant 0 : i32
    %c0_i32_2 = arith.constant 0 : i32
    return %c0_i32, %c0_i32_0, %c0_i32_1 : i32, i32, i32
  }
  func.func @transform_4(%arg0: i32) -> (i32, i32, i32) {
    %c0_i32 = arith.constant 0 : i32
    %c0_i32_0 = arith.constant 0 : i32
    %c0_i32_1 = arith.constant 0 : i32
    %c0_i32_2 = arith.constant 0 : i32
    return %c0_i32, %c0_i32_0, %c0_i32_1 : i32, i32, i32
  }
  func.func @transform_5(%arg0: i32) -> (i32, i32, i32) {
    %c0_i32 = arith.constant 0 : i32
    %c0_i32_0 = arith.constant 0 : i32
    %c0_i32_1 = arith.constant 0 : i32
    %c0_i32_2 = arith.constant 0 : i32
    return %c0_i32, %c0_i32_0, %c0_i32_1 : i32, i32, i32
  }
  func.func @transform_6(%arg0: i32) -> (i32, i32, i32) {
    %c0_i32 = arith.constant 0 : i32
    %c0_i32_0 = arith.constant 0 : i32
    %c0_i32_1 = arith.constant 0 : i32
    return %arg0, %c0_i32, %c0_i32_0 : i32, i32, i32
  }
}

</mosaic_0001>

<llo_original>
// kernel: decoder_se_block_v3.1
$region0: #{decoder_se_block_v3.1}
  #allocation0 [shape = 'u32[]', space=smem, size = 0x4, offset = 0x4, fixed_abs, tag = 'smem constant byte address 0x4 - core index']
  #allocation1 [shape = 'u32[72,128]{1,0:T(1,128)}', space=vmem, size = 0x9000, scoped, tag = 'internal scratch']
  %s0 = inlined_call_operand.vmem [shape: f32[2,16,64], index: 0, kind: input, shape index: {}]
  %s1 = inlined_call_operand.hbm [shape: f32[64,128], index: 1, kind: input, shape index: {}]
  %s2 = inlined_call_operand.vmem [shape: f32[3,32,16], index: 2, kind: input, shape index: {}]
  %s3 = inlined_call_operand.hbm [shape: f32[3,128,256], index: 3, kind: input, shape index: {}]
  %s4 = inlined_call_operand.hbm [shape: f32[3,256,512], index: 4, kind: input, shape index: {}]
  %s5 = inlined_call_operand.hbm [shape: f32[2,32,32], index: 5, kind: input, shape index: {}]
  %s6 = inlined_call_operand.vmem [shape: f32[2,32,512], index: 6, kind: output, shape index: {}]
  %s7 = sld [smem:[#allocation0]]
  $region73: #{decoder_se_block_v3.1} parent=0
    _
  %s9 = ssub.s32 1, %s7
  %s10 = scalar_select 0, %s9, %s7
  $region1: #{decoder_se_block_v3.1} parent=0
    #allocation2 [shape = 'u8[32768]{0}', space=vmem, size = 0x8000, scoped, tag = 'input window, operand 1, single buffered']
    #allocation3 [shape = 's32[2]{0}', space=sflag, size = 0x8, scoped, tag = 'scoped memory for decoder_se_block_v3.1']
    #allocation4 [shape = 'u8[393216]{0}', space=vmem, size = 0x60000, scoped, tag = 'input window, operand 3, single buffered']
    #allocation5 [shape = 's32[1]{0}', space=sflag, size = 0x4, scoped, tag = 'scoped memory for decoder_se_block_v3.1']
    #allocation6 [shape = 'u8[1572864]{0}', space=vmem, size = 0x180000, scoped, tag = 'input window, operand 4, single buffered']
    #allocation7 [shape = 'u8[32768]{0}', space=vmem, size = 0x8000, scoped, tag = 'input window, operand 5, single buffered']
    #allocation8 [shape = 's32[1]{0}', space=sflag, size = 0x4, scoped, tag = 'scoped memory for decoder_se_block_v3.1']
    %11 = vsyncpa [#allocation3], 0
    %12 = vsyncpa [#allocation5], 0
    %13 = vsyncpa [#allocation8], 0
    loop: start=0, step=1, limit=4
    $region2: #{decoder_se_block_v3.1} parent=1 // loop_pre_header
      _
    $region3: #{decoder_se_block_v3.1} parent=1 // loop_header
      %s15 = sphi 0, %s19
      %p16 = scmp.ge.s32.totalorder %s15, 4
      %s25 = sphi 0, %s27
      %s28 = sphi 0, %s25
      %s29 = sphi 0, %s28
      %s45 = sphi 0, %s29
      %s49 = sphi 0, %s49
      %s51 = sphi 0, %s49
      %s52 = sphi 0, %s51
      %s66 = sphi 0, %s52
      %s70 = sphi 0, %s70
      %s72 = sphi 0, %s70
      %s73 = sphi 0, %s72
      %s87 = sphi 0, %s73
      %s91 = sphi 0, %s91
      %s93 = sphi 0, %s91
      %s94 = sphi 0, %s93
      %s108 = sphi 0, %s94
      %s112 = sphi 0, %s112
      %s114 = sphi 0, %s112
      %s115 = sphi 0, %s114
      %s129 = sphi 0, %s115
      %s133 = sphi 0, %s133
      %s135 = sphi 0, %s133
      %s136 = sphi 0, %s135
      %s150 = sphi 0, %s136
      %s156 = sphi 0, %s158
      %s159 = sphi 0, %s156
      %s160 = sphi 0, %s159
      %s176 = sphi 0, %s160
    $region4: #{decoder_se_block_v3.1} parent=1 // loop_header_branch
      %18 = sbr.rel (%p16) target = $region8
    $region5: #{decoder_se_block_v3.1} parent=1 // loop_body
      %s20 = ssub.s32 %s15, 1
      %s21 = ssub.s32 %s15, 2
      %s22 = sadd.s32 %s15, 1
      %s23 = ssub.s32 %s15, %s22
      %p24 = scmp.eq.s32.totalorder %s23, 0
      %s26 = sadd.s32 %s25, 1
      %s27 = scalar_select %p24, %s25, %s26
      %p30 = pneg %p24
      %p31 = scmp.eq.s32.totalorder %s15, 1
      %p32 = por %p30, %p31
      %p33 = scmp.ne.s32.totalorder %s25, %s28
      %p34 = scmp.eq.s32.totalorder %s15, 0
      %p35 = por %p33, %p34
      %p36 = scmp.ne.s32.totalorder %s25, %s28
      %p37 = scmp.eq.s32.totalorder %s20, 1
      %p38 = por %p36, %p37
      %p39 = scmp.ne.s32.totalorder %s28, %s29
      %p40 = scmp.eq.s32.totalorder %s20, 0
      %p41 = por %p39, %p40
      %p42 = scmp.ne.s32.totalorder %s28, %s29
      %p43 = scmp.eq.s32.totalorder %s21, 1
      %p44 = por %p42, %p43
      %p46 = scmp.ne.s32.totalorder %s29, %s45
      %p47 = scmp.eq.s32.totalorder %s21, 0
      %p48 = por %p46, %p47
      %s50 = sadd.s32 %s49, 1
      %p53 = scmp.eq.s32.totalorder %s15, 1
      %p54 = scmp.ne.s32.totalorder %s49, %s51
      %p55 = scmp.eq.s32.totalorder %s15, 0
      %p56 = por %p54, %p55
      %p57 = scmp.ne.s32.totalorder %s49, %s51
      %p58 = scmp.eq.s32.totalorder %s20, 1
      %p59 = por %p57, %p58
      %p60 = scmp.ne.s32.totalorder %s51, %s52
      %p61 = scmp.eq.s32.totalorder %s20, 0
      %p62 = por %p60, %p61
      %p63 = scmp.ne.s32.totalorder %s51, %s52
      %p64 = scmp.eq.s32.totalorder %s21, 1
      %p65 = por %p63, %p64
      %p67 = scmp.ne.s32.totalorder %s52, %s66
      %p68 = scmp.eq.s32.totalorder %s21, 0
      %p69 = por %p67, %p68
      %s71 = sadd.s32 %s70, 1
      %p74 = scmp.eq.s32.totalorder %s15, 1
      %p75 = scmp.ne.s32.totalorder %s70, %s72
      %p76 = scmp.eq.s32.totalorder %s15, 0
      %p77 = por %p75, %p76
      %p78 = scmp.ne.s32.totalorder %s70, %s72
      %p79 = scmp.eq.s32.totalorder %s20, 1
      %p80 = por %p78, %p79
      %p81 = scmp.ne.s32.totalorder %s72, %s73
      %p82 = scmp.eq.s32.totalorder %s20, 0
      %p83 = por %p81, %p82
      %p84 = scmp.ne.s32.totalorder %s72, %s73
      %p85 = scmp.eq.s32.totalorder %s21, 1
      %p86 = por %p84, %p85
      %p88 = scmp.ne.s32.totalorder %s73, %s87
      %p89 = scmp.eq.s32.totalorder %s21, 0
      %p90 = por %p88, %p89
      %s92 = sadd.s32 %s91, 1
      %p95 = scmp.eq.s32.totalorder %s15, 1
      %p96 = scmp.ne.s32.totalorder %s91, %s93
      %p97 = scmp.eq.s32.totalorder %s15, 0
      %p98 = por %p96, %p97
      %p99 = scmp.ne.s32.totalorder %s91, %s93
      %p100 = scmp.eq.s32.totalorder %s20, 1
      %p101 = por %p99, %p100
      %p102 = scmp.ne.s32.totalorder %s93, %s94
      %p103 = scmp.eq.s32.totalorder %s20, 0
      %p104 = por %p102, %p103
      %p105 = scmp.ne.s32.totalorder %s93, %s94
      %p106 = scmp.eq.s32.totalorder %s21, 1
      %p107 = por %p105, %p106
      %p109 = scmp.ne.s32.totalorder %s94, %s108
      %p110 = scmp.eq.s32.totalorder %s21, 0
      %p111 = por %p109, %p110
      %s113 = sadd.s32 %s112, 1
      %p116 = scmp.eq.s32.totalorder %s15, 1
      %p117 = scmp.ne.s32.totalorder %s112, %s114
      %p118 = scmp.eq.s32.totalorder %s15, 0
      %p119 = por %p117, %p118
      %p120 = scmp.ne.s32.totalorder %s112, %s114
      %p121 = scmp.eq.s32.totalorder %s20, 1
      %p122 = por %p120, %p121
      %p123 = scmp.ne.s32.totalorder %s114, %s115
      %p124 = scmp.eq.s32.totalorder %s20, 0
      %p125 = por %p123, %p124
      %p126 = scmp.ne.s32.totalorder %s114, %s115
      %p127 = scmp.eq.s32.totalorder %s21, 1
      %p128 = por %p126, %p127
      %p130 = scmp.ne.s32.totalorder %s115, %s129
      %p131 = scmp.eq.s32.totalorder %s21, 0
      %p132 = por %p130, %p131
      %s134 = sadd.s32 %s133, 1
      %p137 = scmp.eq.s32.totalorder %s15, 1
      %p138 = scmp.ne.s32.totalorder %s133, %s135
      %p139 = scmp.eq.s32.totalorder %s15, 0
      %p140 = por %p138, %p139
      %p141 = scmp.ne.s32.totalorder %s133, %s135
      %p142 = scmp.eq.s32.totalorder %s20, 1
      %p143 = por %p141, %p142
      %p144 = scmp.ne.s32.totalorder %s135, %s136
      %p145 = scmp.eq.s32.totalorder %s20, 0
      %p146 = por %p144, %p145
      %p147 = scmp.ne.s32.totalorder %s135, %s136
      %p148 = scmp.eq.s32.totalorder %s21, 1
      %p149 = por %p147, %p148
      %p151 = scmp.ne.s32.totalorder %s136, %s150
      %p152 = scmp.eq.s32.totalorder %s21, 0
      %p153 = por %p151, %p152
      %s154 = ssub.s32 %s15, %s22
      %p155 = scmp.eq.s32.totalorder %s154, 0
      %s157 = sadd.s32 %s156, 1
      %s158 = scalar_select %p155, %s156, %s157
      %p161 = pneg %p155
      %p162 = scmp.eq.s32.totalorder %s15, 1
      %p163 = por %p161, %p162
      %p164 = scmp.ne.s32.totalorder %s156, %s159
      %p165 = scmp.eq.s32.totalorder %s15, 0
      %p166 = por %p164, %p165
      %p167 = scmp.ne.s32.totalorder %s156, %s159
      %p168 = scmp.eq.s32.totalorder %s20, 1
      %p169 = por %p167, %p168
      %p170 = scmp.ne.s32.totalorder %s159, %s160
      %p171 = scmp.eq.s32.totalorder %s20, 0
      %p172 = por %p170, %p171
      %p173 = scmp.ne.s32.totalorder %s159, %s160
      %p174 = scmp.eq.s32.totalorder %s21, 1
      %p175 = por %p173, %p174
      %p177 = scmp.ne.s32.totalorder %s160, %s176
      %p178 = scmp.eq.s32.totalorder %s21, 0
      %p179 = por %p177, %p178
      %p180 = scmp.le.s32.totalorder 1, %s15
      %p181 = scmp.lt.s32.totalorder %s15, 3
      %p182 = pnand %p180, %p181
      %p183 = pneg %p182
      // Predicated region
      $region9: #{decoder_se_block_v3.1} parent=5 // pred_check
        _
      $region10: #{decoder_se_block_v3.1} parent=5 // pred_check_branch
        %185 = sbr.rel (%p182) target = $region12
      $region11: #{decoder_se_block_v3.1} parent=5 // pred_region
        %s186 = ssub.s32 %s15, 1
        // Predicated region
        $region13: #{decoder_se_block_v3.1} parent=11 // pred_check
          %p187 = pneg %p62
        $region14: #{decoder_se_block_v3.1} parent=11 // pred_check_branch
          %189 = sbr.rel (%p187) target = $region16
        $region15: #{decoder_se_block_v3.1} parent=11 // pred_region
          %191 = vsyncadd [#allocation3], 0
          %s192 = sshll.u32 %s1, 4
          %s193 = int_to_ptr.hbm [resolvable:$true] %s192
          %s194 = sshll.u32 [#allocation2], 4
          %s195 = int_to_ptr.vmem [resolvable:$true] %s194
          %200 = dma.hbm_to_vmem [thread:$0]  %s193, 1024, %s195, [#allocation3], 128, 128, 8
        $region16: #{decoder_se_block_v3.1} parent=11 // pred_fallthru
          _
        // Predicated region
        $region17: #{decoder_se_block_v3.1} parent=11 // pred_check
          %p201 = pneg %p83
        $region18: #{decoder_se_block_v3.1} parent=11 // pred_check_branch
          %203 = sbr.rel (%p201) target = $region20
        $region19: #{decoder_se_block_v3.1} parent=11 // pred_region
          _
        $region20: #{decoder_se_block_v3.1} parent=11 // pred_fallthru
          _
        // Predicated region
        $region21: #{decoder_se_block_v3.1} parent=11 // pred_check
          %p204 = pneg %p104
        $region22: #{decoder_se_block_v3.1} parent=11 // pred_check_branch
          %206 = sbr.rel (%p204) target = $region24
        $region23: #{decoder_se_block_v3.1} parent=11 // pred_region
          %208 = vsyncadd [#allocation5], 0
          %s209 = sshll.u32 %s3, 4
          %s210 = int_to_ptr.hbm [resolvable:$true] %s209
          %s211 = sshll.u32 [#allocation4], 4
          %s212 = int_to_ptr.vmem [resolvable:$true] %s211
          %217 = dma.hbm_to_vmem [thread:$0]  %s210, 12288, %s212, [#allocation5], 256, 256, 16
        $region24: #{decoder_se_block_v3.1} parent=11 // pred_fallthru
          _
        // Predicated region
        $region25: #{decoder_se_block_v3.1} parent=11 // pred_check
          %p218 = pneg %p125
        $region26: #{decoder_se_block_v3.1} parent=11 // pred_check_branch
          %220 = sbr.rel (%p218) target = $region28
        $region27: #{decoder_se_block_v3.1} parent=11 // pred_region
          %222 = vsyncadd [#allocation5], 0
          %s223 = sshll.u32 %s4, 4
          %s224 = int_to_ptr.hbm [resolvable:$true] %s223
          %s225 = sshll.u32 [#allocation6], 4
          %s226 = int_to_ptr.vmem [resolvable:$true] %s225
          %231 = dma.hbm_to_vmem [thread:$0]  %s224, 49152, %s226, [#allocation5], 512, 512, 32
        $region28: #{decoder_se_block_v3.1} parent=11 // pred_fallthru
          _
        // Predicated region
        $region29: #{decoder_se_block_v3.1} parent=11 // pred_check
          %p232 = pneg %p146
        $region30: #{decoder_se_block_v3.1} parent=11 // pred_check_branch
          %234 = sbr.rel (%p232) target = $region32
        $region31: #{decoder_se_block_v3.1} parent=11 // pred_region
          %236 = vsyncadd [#allocation8], 0
          %s237 = sshll.u32 %s5, 4
          %s238 = int_to_ptr.hbm [resolvable:$true] %s237
          %s239 = sshll.u32 [#allocation7], 4
          %s240 = int_to_ptr.vmem [resolvable:$true] %s239
          %245 = dma.hbm_to_vmem [thread:$0]  %s238, 1024, %s240, [#allocation8], 128, 128, 8
        $region32: #{decoder_se_block_v3.1} parent=11 // pred_fallthru
          _
      $region12: #{decoder_se_block_v3.1} parent=5 // pred_fallthru
        _
      %p246 = scmp.lt.s32.totalorder %s15, 2
      // Predicated region
      $region33: #{decoder_se_block_v3.1} parent=5 // pred_check
        %p247 = pneg %p246
      $region34: #{decoder_se_block_v3.1} parent=5 // pred_check_branch
        %249 = sbr.rel (%p247) target = $region36
      $region35: #{decoder_se_block_v3.1} parent=5 // pred_region
        // Predicated region
        $region37: #{decoder_se_block_v3.1} parent=35 // pred_check
          %p250 = pneg %p35
        $region38: #{decoder_se_block_v3.1} parent=35 // pred_check_branch
          %252 = sbr.rel (%p250) target = $region40
        $region39: #{decoder_se_block_v3.1} parent=35 // pred_region
          %p253 = scmp.lt.s32.totalorder %s15, 1
          %s254 = scalar_select %p253, %s15, 1
          %s255 = smul.addr %s254, 2
          %s256 = smul.addr %s255, 8
          %s257 = scalar_lea.vmem %s0, %s256
        $region40: #{decoder_se_block_v3.1} parent=35 // pred_fallthru
          _
      $region36: #{decoder_se_block_v3.1} parent=5 // pred_fallthru
        _
      %p258 = scmp.le.s32.totalorder 1, %s15
      %p259 = scmp.lt.s32.totalorder %s15, 3
      %p260 = pnand %p258, %p259
      %p261 = pneg %p260
      // Predicated region
      $region41: #{decoder_se_block_v3.1} parent=5 // pred_check
        _
      $region42: #{decoder_se_block_v3.1} parent=5 // pred_check_branch
        %263 = sbr.rel (%p260) target = $region44
      $region43: #{decoder_se_block_v3.1} parent=5 // pred_region
        %s264 = ssub.s32 %s15, 1
        // Predicated region
        $region45: #{decoder_se_block_v3.1} parent=43 // pred_check
          %p265 = pneg %p62
        $region46: #{decoder_se_block_v3.1} parent=43 // pred_check_branch
          %267 = sbr.rel (%p265) target = $region48
        $region47: #{decoder_se_block_v3.1} parent=43 // pred_region
          %269 = dma.done [#allocation3], 1024
        $region48: #{decoder_se_block_v3.1} parent=43 // pred_fallthru
          _
        // Predicated region
        $region49: #{decoder_se_block_v3.1} parent=43 // pred_check
          %p270 = pneg %p104
        $region50: #{decoder_se_block_v3.1} parent=43 // pred_check_branch
          %272 = sbr.rel (%p270) target = $region52
        $region51: #{decoder_se_block_v3.1} parent=43 // pred_region
          %274 = dma.done [#allocation5], 12288
        $region52: #{decoder_se_block_v3.1} parent=43 // pred_fallthru
          _
        // Predicated region
        $region53: #{decoder_se_block_v3.1} parent=43 // pred_check
          %p275 = pneg %p125
        $region54: #{decoder_se_block_v3.1} parent=43 // pred_check_branch
          %277 = sbr.rel (%p275) target = $region56
        $region55: #{decoder_se_block_v3.1} parent=43 // pred_region
          %279 = dma.done [#allocation5], 49152
        $region56: #{decoder_se_block_v3.1} parent=43 // pred_fallthru
          _
        // Predicated region
        $region57: #{decoder_se_block_v3.1} parent=43 // pred_check
          %p280 = pneg %p146
        $region58: #{decoder_se_block_v3.1} parent=43 // pred_check_branch
          %282 = sbr.rel (%p280) target = $region60
        $region59: #{decoder_se_block_v3.1} parent=43 // pred_region
          %284 = dma.done [#allocation8], 1024
        $region60: #{decoder_se_block_v3.1} parent=43 // pred_fallthru
          _
        %p285 = scmp.lt.s32.totalorder %s20, 1
        %s286 = scalar_select %p285, %s20, 1
        %s287 = smul.addr %s286, 2
        %s288 = smul.addr %s287, 8
        %s289 = scalar_lea.vmem %s0, %s288
        %p290 = pneg %p41
        %p291 = pneg %p38
        %p292 = pneg %p62
        %p293 = pneg %p59
        %p294 = pneg %p83
        %p295 = pneg %p80
        %p296 = pneg %p104
        %p297 = pneg %p101
        %p298 = pneg %p125
        %p299 = pneg %p122
        %p300 = pneg %p146
        %p301 = pneg %p143
        %p302 = pneg %p172
        %p303 = pneg %p169
        %p304 = scmp.lt.s32.totalorder %s20, 1
        %s305 = scalar_select %p304, %s20, 1
        %s306 = smul.addr %s305, 16
        %s307 = smul.addr %s306, 8
        %s308 = scalar_lea.vmem %s6, %s307
        %p309 = scmp.lt.s32.totalorder %s20, 1
        %s310 = scalar_select %p309, %s20, 1
        %s311 = smul.addr %s310, 2
        %s312 = smul.addr %s311, 8
        %s313 = scalar_lea.vmem %s0, %s312
        %p314 = scmp.lt.s32.totalorder %s20, 1
        %s315 = scalar_select %p314, %s20, 1
        %s316 = smul.addr %s315, 16
        %s317 = smul.addr %s316, 8
        %s318 = scalar_lea.vmem %s6, %s317
        %v319 = vld [vmem:[%s313] sm:$0xff]
        %v320 = vld [vmem:[%s313 + $0x8] sm:$0xff]
        %v321 = vld [vmem:[#allocation2] sm:$0xff]
        %v322 = vld [vmem:[#allocation2 + $0x8] sm:$0xff]
        %v323 = vld [vmem:[#allocation2 + $0x10] sm:$0xff]
        %v324 = vld [vmem:[#allocation2 + $0x18] sm:$0xff]
        %v325 = vld [vmem:[#allocation2 + $0x20] sm:$0xff]
        %v326 = vld [vmem:[#allocation2 + $0x28] sm:$0xff]
        %v327 = vld [vmem:[#allocation2 + $0x30] sm:$0xff]
        %v328 = vld [vmem:[#allocation2 + $0x38] sm:$0xff]
        %vm329 = vcmask 523264
        %v331 = vsel %vm329, %v319, 0
        %v334 = vsel %vm329, %v320, 0
        %336 = vmatpush.msra.mxu0 0.0
        %337 = vmatpush.msra.mxu0 0.0
        %338 = vmatpush.msra.mxu0 0.0
        %339 = vmatpush.msra.mxu0 0.0
        %340 = vmatpush.msra.mxu0 0.0
        %341 = vmatpush.msra.mxu0 0.0
        %342 = vmatpush.msra.mxu0 0.0
        %343 = vmatpush.msra.mxu0 0.0
        %344 = vmatpush.msra.mxu0 %v328
        %345 = vmatpush.msra.mxu0 %v327
        %346 = vmatpush.msra.mxu0 %v326
        %347 = vmatpush.msra.mxu0 %v325
        %348 = vmatpush.msra.mxu0 %v324
        %349 = vmatpush.msra.mxu0 %v323
        %350 = vmatpush.msra.mxu0 %v322
        %351 = vmatpush.msra.mxu0 %v321
        %352 = vmatmul.f32.gmra.mxu0 %v331
        %v353 = vpop.f32.mrf.mxu0
        %v354 = vadd.f32 0.0, %v353
        %355 = vmatmul.f32.gmra.mxu0 %v334
        %v356 = vpop.f32.mrf.mxu0
        %v357 = vadd.f32 0.0, %v356
        %358 = vdwg.mxu0
        %v359 = vld [vmem:[%s2] sm:$0xff]
        %v360 = vld [vmem:[%s2 + $0x8] sm:$0xff]
        %v361 = vld [vmem:[%s2 + $0x10] sm:$0xff]
        %v362 = vld [vmem:[%s2 + $0x18] sm:$0xff]
        %vm363 = vcmask 130048
        %v365 = vsel %vm363, %v359, 0
        %v368 = vsel %vm363, %v360, 0
        %v371 = vsel %vm363, %v361, 0
        %v374 = vsel %vm363, %v362, 0
        %376 = vmatpush.msra.mxu0 0.0
        %377 = vmatpush.msra.mxu0 0.0
        %378 = vmatpush.msra.mxu0 0.0
        %379 = vmatpush.msra.mxu0 0.0
        %380 = vmatpush.msra.mxu0 0.0
        %381 = vmatpush.msra.mxu0 0.0
        %382 = vmatpush.msra.mxu0 0.0
        %383 = vmatpush.msra.mxu0 0.0
        %384 = vmatpush.msra.mxu0 0.0
        %385 = vmatpush.msra.mxu0 0.0
        %386 = vmatpush.msra.mxu0 0.0
        %387 = vmatpush.msra.mxu0 0.0
        %388 = vmatpush.msra.mxu0 0.0
        %389 = vmatpush.msra.mxu0 0.0
        %390 = vmatpush.msra.mxu0 %v357
        %391 = vmatpush.msra.mxu0 %v354
        %392 = vmatmul.f32.gmra.mxu0 %v365
        %v393 = vpop.f32.mrf.mxu0
        %v394 = vadd.f32 0.0, %v393
        %395 = vmatmul.f32.gmra.mxu0 %v368
        %v396 = vpop.f32.mrf.mxu0
        %v397 = vadd.f32 0.0, %v396
        %398 = vmatmul.f32.gmra.mxu0 %v371
        %v399 = vpop.f32.mrf.mxu0
        %v400 = vadd.f32 0.0, %v399
        %401 = vmatmul.f32.gmra.mxu0 %v374
        %v402 = vpop.f32.mrf.mxu0
        %v403 = vadd.f32 0.0, %v402
        %404 = vdwg.mxu0
        %v405 = vld [vmem:[#allocation4] sm:$0xff]
        %v406 = vld [vmem:[#allocation4 + $0x8] sm:$0xff]
        %v407 = vld [vmem:[#allocation4 + $0x10] sm:$0xff]
        %v408 = vld [vmem:[#allocation4 + $0x18] sm:$0xff]
        %v409 = vld [vmem:[#allocation4 + $0x20] sm:$0xff]
        %v410 = vld [vmem:[#allocation4 + $0x28] sm:$0xff]
        %v411 = vld [vmem:[#allocation4 + $0x30] sm:$0xff]
        %v412 = vld [vmem:[#allocation4 + $0x38] sm:$0xff]
        %v413 = vld [vmem:[#allocation4 + $0x40] sm:$0xff]
        %v414 = vld [vmem:[#allocation4 + $0x48] sm:$0xff]
        %v415 = vld [vmem:[#allocation4 + $0x50] sm:$0xff]
        %v416 = vld [vmem:[#allocation4 + $0x58] sm:$0xff]
        %v417 = vld [vmem:[#allocation4 + $0x60] sm:$0xff]
        %v418 = vld [vmem:[#allocation4 + $0x68] sm:$0xff]
        %v419 = vld [vmem:[#allocation4 + $0x70] sm:$0xff]
        %v420 = vld [vmem:[#allocation4 + $0x78] sm:$0xff]
        %v421 = vld [vmem:[#allocation4 + $0x80] sm:$0xff]
        %v422 = vld [vmem:[#allocation4 + $0x88] sm:$0xff]
        %v423 = vld [vmem:[#allocation4 + $0x90] sm:$0xff]
        %v424 = vld [vmem:[#allocation4 + $0x98] sm:$0xff]
        %v425 = vld [vmem:[#allocation4 + $0xa0] sm:$0xff]
        %v426 = vld [vmem:[#allocation4 + $0xa8] sm:$0xff]
        %v427 = vld [vmem:[#allocation4 + $0xb0] sm:$0xff]
        %v428 = vld [vmem:[#allocation4 + $0xb8] sm:$0xff]
        %v429 = vld [vmem:[#allocation4 + $0xc0] sm:$0xff]
        %v430 = vld [vmem:[#allocation4 + $0xc8] sm:$0xff]
        %v431 = vld [vmem:[#allocation4 + $0xd0] sm:$0xff]
        %v432 = vld [vmem:[#allocation4 + $0xd8] sm:$0xff]
        %v433 = vld [vmem:[#allocation4 + $0xe0] sm:$0xff]
        %v434 = vld [vmem:[#allocation4 + $0xe8] sm:$0xff]
        %v435 = vld [vmem:[#allocation4 + $0xf0] sm:$0xff]
        %v436 = vld [vmem:[#allocation4 + $0xf8] sm:$0xff]
        %s437 = scalar_lea.vmem %s2, 32
        %v438 = vld [vmem:[%s437] sm:$0xff]
        %v439 = vld [vmem:[%s437 + $0x8] sm:$0xff]
        %v440 = vld [vmem:[%s437 + $0x10] sm:$0xff]
        %v441 = vld [vmem:[%s437 + $0x18] sm:$0xff]
        %v443 = vsel %vm363, %v438, 0
        %v446 = vsel %vm363, %v439, 0
        %v449 = vsel %vm363, %v440, 0
        %v452 = vsel %vm363, %v441, 0
        %454 = vmatpush.msra.mxu0 0.0
        %455 = vmatpush.msra.mxu0 0.0
        %456 = vmatpush.msra.mxu0 0.0
        %457 = vmatpush.msra.mxu0 0.0
        %458 = vmatpush.msra.mxu0 0.0
        %459 = vmatpush.msra.mxu0 0.0
        %460 = vmatpush.msra.mxu0 0.0
        %461 = vmatpush.msra.mxu0 0.0
        %462 = vmatpush.msra.mxu0 0.0
        %463 = vmatpush.msra.mxu0 0.0
        %464 = vmatpush.msra.mxu0 0.0
        %465 = vmatpush.msra.mxu0 0.0
        %466 = vmatpush.msra.mxu0 0.0
        %467 = vmatpush.msra.mxu0 0.0
        %468 = vmatpush.msra.mxu0 %v357
        %469 = vmatpush.msra.mxu0 %v354
        %470 = vmatmul.f32.gmra.mxu0 %v443
        %v471 = vpop.f32.mrf.mxu0
        %v472 = vadd.f32 0.0, %v471
        %473 = vmatmul.f32.gmra.mxu0 %v446
        %v474 = vpop.f32.mrf.mxu0
        %v475 = vadd.f32 0.0, %v474
        %476 = vmatmul.f32.gmra.mxu0 %v449
        %v477 = vpop.f32.mrf.mxu0
        %v478 = vadd.f32 0.0, %v477
        %479 = vmatmul.f32.gmra.mxu0 %v452
        %v480 = vpop.f32.mrf.mxu0
        %v481 = vadd.f32 0.0, %v480
        %482 = vdwg.mxu0
        %s483 = scalar_lea.vmem [#allocation4], 256
        %v484 = vld [vmem:[%s483] sm:$0xff]
        %v485 = vld [vmem:[%s483 + $0x8] sm:$0xff]
        %v486 = vld [vmem:[%s483 + $0x10] sm:$0xff]
        %v487 = vld [vmem:[%s483 + $0x18] sm:$0xff]
        %v488 = vld [vmem:[%s483 + $0x20] sm:$0xff]
        %v489 = vld [vmem:[%s483 + $0x28] sm:$0xff]
        %v490 = vld [vmem:[%s483 + $0x30] sm:$0xff]
        %v491 = vld [vmem:[%s483 + $0x38] sm:$0xff]
        %v492 = vld [vmem:[%s483 + $0x40] sm:$0xff]
        %v493 = vld [vmem:[%s483 + $0x48] sm:$0xff]
        %v494 = vld [vmem:[%s483 + $0x50] sm:$0xff]
        %v495 = vld [vmem:[%s483 + $0x58] sm:$0xff]
        %v496 = vld [vmem:[%s483 + $0x60] sm:$0xff]
        %v497 = vld [vmem:[%s483 + $0x68] sm:$0xff]
        %v498 = vld [vmem:[%s483 + $0x70] sm:$0xff]
        %v499 = vld [vmem:[%s483 + $0x78] sm:$0xff]
        %v500 = vld [vmem:[%s483 + $0x80] sm:$0xff]
        %v501 = vld [vmem:[%s483 + $0x88] sm:$0xff]
        %v502 = vld [vmem:[%s483 + $0x90] sm:$0xff]
        %v503 = vld [vmem:[%s483 + $0x98] sm:$0xff]
        %v504 = vld [vmem:[%s483 + $0xa0] sm:$0xff]
        %v505 = vld [vmem:[%s483 + $0xa8] sm:$0xff]
        %v506 = vld [vmem:[%s483 + $0xb0] sm:$0xff]
        %v507 = vld [vmem:[%s483 + $0xb8] sm:$0xff]
        %v508 = vld [vmem:[%s483 + $0xc0] sm:$0xff]
        %v509 = vld [vmem:[%s483 + $0xc8] sm:$0xff]
        %v510 = vld [vmem:[%s483 + $0xd0] sm:$0xff]
        %v511 = vld [vmem:[%s483 + $0xd8] sm:$0xff]
        %v512 = vld [vmem:[%s483 + $0xe0] sm:$0xff]
        %v513 = vld [vmem:[%s483 + $0xe8] sm:$0xff]
        %v514 = vld [vmem:[%s483 + $0xf0] sm:$0xff]
        %v515 = vld [vmem:[%s483 + $0xf8] sm:$0xff]
        %516 = vmatpush.msra.mxu0 %v514
        %517 = vmatpush.msra.mxu0 %v512
        %518 = vmatpush.msra.mxu0 %v510
        %519 = vmatpush.msra.mxu0 %v508
        %520 = vmatpush.msra.mxu0 %v506
        %521 = vmatpush.msra.mxu0 %v504
        %522 = vmatpush.msra.mxu0 %v502
        %523 = vmatpush.msra.mxu0 %v500
        %524 = vmatpush.msra.mxu0 %v498
        %525 = vmatpush.msra.mxu0 %v496
        %526 = vmatpush.msra.mxu0 %v494
        %527 = vmatpush.msra.mxu0 %v492
        %528 = vmatpush.msra.mxu0 %v490
        %529 = vmatpush.msra.mxu0 %v488
        %530 = vmatpush.msra.mxu0 %v486
        %531 = vmatpush.msra.mxu0 %v484
        %532 = vmatmul.f32.gmra.mxu0 %v472
        %v533 = vpop.f32.mrf.mxu0
        %v534 = vadd.f32 0.0, %v533
        %535 = vmatmul.f32.gmra.mxu0 %v475
        %v536 = vpop.f32.mrf.mxu0
        %v537 = vadd.f32 0.0, %v536
        %538 = vmatmul.f32.gmra.mxu0 %v478
        %v539 = vpop.f32.mrf.mxu0
        %v540 = vadd.f32 0.0, %v539
        %541 = vmatmul.f32.gmra.mxu0 %v481
        %v542 = vpop.f32.mrf.mxu0
        %v543 = vadd.f32 0.0, %v542
        %544 = vdwg.mxu0
        %545 = vmatpush.msra.mxu0 %v515
        %546 = vmatpush.msra.mxu0 %v513
        %547 = vmatpush.msra.mxu0 %v511
        %548 = vmatpush.msra.mxu0 %v509
        %549 = vmatpush.msra.mxu0 %v507
        %550 = vmatpush.msra.mxu0 %v505
        %551 = vmatpush.msra.mxu0 %v503
        %552 = vmatpush.msra.mxu0 %v501
        %553 = vmatpush.msra.mxu0 %v499
        %554 = vmatpush.msra.mxu0 %v497
        %555 = vmatpush.msra.mxu0 %v495
        %556 = vmatpush.msra.mxu0 %v493
        %557 = vmatpush.msra.mxu0 %v491
        %558 = vmatpush.msra.mxu0 %v489
        %559 = vmatpush.msra.mxu0 %v487
        %560 = vmatpush.msra.mxu0 %v485
        %561 = vmatmul.f32.gmra.mxu0 %v472
        %v562 = vpop.f32.mrf.mxu0
        %v563 = vadd.f32 0.0, %v562
        %564 = vmatmul.f32.gmra.mxu0 %v475
        %v565 = vpop.f32.mrf.mxu0
        %v566 = vadd.f32 0.0, %v565
        %567 = vmatmul.f32.gmra.mxu0 %v478
        %v568 = vpop.f32.mrf.mxu0
        %v569 = vadd.f32 0.0, %v568
        %570 = vmatmul.f32.gmra.mxu0 %v481
        %v571 = vpop.f32.mrf.mxu0
        %v572 = vadd.f32 0.0, %v571
        %573 = vdwg.mxu0
        %574 = vmatpush.msra.mxu0 %v435
        %575 = vmatpush.msra.mxu0 %v433
        %576 = vmatpush.msra.mxu0 %v431
        %577 = vmatpush.msra.mxu0 %v429
        %578 = vmatpush.msra.mxu0 %v427
        %579 = vmatpush.msra.mxu0 %v425
        %580 = vmatpush.msra.mxu0 %v423
        %581 = vmatpush.msra.mxu0 %v421
        %582 = vmatpush.msra.mxu0 %v419
        %583 = vmatpush.msra.mxu0 %v417
        %584 = vmatpush.msra.mxu0 %v415
        %585 = vmatpush.msra.mxu0 %v413
        %586 = vmatpush.msra.mxu0 %v411
        %587 = vmatpush.msra.mxu0 %v409
        %588 = vmatpush.msra.mxu0 %v407
        %589 = vmatpush.msra.mxu0 %v405
        %590 = vmatmul.f32.gmra.mxu0 %v394
        %v591 = vpop.f32.mrf.mxu0
        %v592 = vadd.f32 %v534, %v591
        %593 = vmatmul.f32.gmra.mxu0 %v397
        %v594 = vpop.f32.mrf.mxu0
        %v595 = vadd.f32 %v537, %v594
        %596 = vmatmul.f32.gmra.mxu0 %v400
        %v597 = vpop.f32.mrf.mxu0
        %v598 = vadd.f32 %v540, %v597
        %599 = vmatmul.f32.gmra.mxu0 %v403
        %v600 = vpop.f32.mrf.mxu0
        %v601 = vadd.f32 %v543, %v600
        %602 = vdwg.mxu0
        %603 = vmatpush.msra.mxu0 %v436
        %604 = vmatpush.msra.mxu0 %v434
        %605 = vmatpush.msra.mxu0 %v432
        %606 = vmatpush.msra.mxu0 %v430
        %607 = vmatpush.msra.mxu0 %v428
        %608 = vmatpush.msra.mxu0 %v426
        %609 = vmatpush.msra.mxu0 %v424
        %610 = vmatpush.msra.mxu0 %v422
        %611 = vmatpush.msra.mxu0 %v420
        %612 = vmatpush.msra.mxu0 %v418
        %613 = vmatpush.msra.mxu0 %v416
        %614 = vmatpush.msra.mxu0 %v414
        %615 = vmatpush.msra.mxu0 %v412
        %616 = vmatpush.msra.mxu0 %v410
        %617 = vmatpush.msra.mxu0 %v408
        %618 = vmatpush.msra.mxu0 %v406
        %619 = vmatmul.f32.gmra.mxu0 %v394
        %v620 = vpop.f32.mrf.mxu0
        %v621 = vadd.f32 %v563, %v620
        %622 = vmatmul.f32.gmra.mxu0 %v397
        %v623 = vpop.f32.mrf.mxu0
        %v624 = vadd.f32 %v566, %v623
        %625 = vmatmul.f32.gmra.mxu0 %v400
        %v626 = vpop.f32.mrf.mxu0
        %v627 = vadd.f32 %v569, %v626
        %628 = vmatmul.f32.gmra.mxu0 %v403
        %v629 = vpop.f32.mrf.mxu0
        %v630 = vadd.f32 %v572, %v629
        %631 = vdwg.mxu0
        %s632 = scalar_lea.vmem %s2, 64
        %v633 = vld [vmem:[%s632] sm:$0xff]
        %v634 = vld [vmem:[%s632 + $0x8] sm:$0xff]
        %v635 = vld [vmem:[%s632 + $0x10] sm:$0xff]
        %v636 = vld [vmem:[%s632 + $0x18] sm:$0xff]
        %v638 = vsel %vm363, %v633, 0
        %v641 = vsel %vm363, %v634, 0
        %v644 = vsel %vm363, %v635, 0
        %v647 = vsel %vm363, %v636, 0
        %649 = vmatpush.msra.mxu0 0.0
        %650 = vmatpush.msra.mxu0 0.0
        %651 = vmatpush.msra.mxu0 0.0
        %652 = vmatpush.msra.mxu0 0.0
        %653 = vmatpush.msra.mxu0 0.0
        %654 = vmatpush.msra.mxu0 0.0
        %655 = vmatpush.msra.mxu0 0.0
        %656 = vmatpush.msra.mxu0 0.0
        %657 = vmatpush.msra.mxu0 0.0
        %658 = vmatpush.msra.mxu0 0.0
        %659 = vmatpush.msra.mxu0 0.0
        %660 = vmatpush.msra.mxu0 0.0
        %661 = vmatpush.msra.mxu0 0.0
        %662 = vmatpush.msra.mxu0 0.0
        %663 = vmatpush.msra.mxu0 %v357
        %664 = vmatpush.msra.mxu0 %v354
        %665 = vmatmul.f32.gmra.mxu0 %v638
        %v666 = vpop.f32.mrf.mxu0
        %v667 = vadd.f32 0.0, %v666
        %668 = vmatmul.f32.gmra.mxu0 %v641
        %v669 = vpop.f32.mrf.mxu0
        %v670 = vadd.f32 0.0, %v669
        %671 = vmatmul.f32.gmra.mxu0 %v644
        %v672 = vpop.f32.mrf.mxu0
        %v673 = vadd.f32 0.0, %v672
        %674 = vmatmul.f32.gmra.mxu0 %v647
        %v675 = vpop.f32.mrf.mxu0
        %v676 = vadd.f32 0.0, %v675
        %677 = vdwg.mxu0
        %s678 = scalar_lea.vmem [#allocation4], 512
        %v679 = vld [vmem:[%s678] sm:$0xff]
        %v680 = vld [vmem:[%s678 + $0x8] sm:$0xff]
        %v681 = vld [vmem:[%s678 + $0x10] sm:$0xff]
        %v682 = vld [vmem:[%s678 + $0x18] sm:$0xff]
        %v683 = vld [vmem:[%s678 + $0x20] sm:$0xff]
        %v684 = vld [vmem:[%s678 + $0x28] sm:$0xff]
        %v685 = vld [vmem:[%s678 + $0x30] sm:$0xff]
        %v686 = vld [vmem:[%s678 + $0x38] sm:$0xff]
        %v687 = vld [vmem:[%s678 + $0x40] sm:$0xff]
        %v688 = vld [vmem:[%s678 + $0x48] sm:$0xff]
        %v689 = vld [vmem:[%s678 + $0x50] sm:$0xff]
        %v690 = vld [vmem:[%s678 + $0x58] sm:$0xff]
        %v691 = vld [vmem:[%s678 + $0x60] sm:$0xff]
        %v692 = vld [vmem:[%s678 + $0x68] sm:$0xff]
        %v693 = vld [vmem:[%s678 + $0x70] sm:$0xff]
        %v694 = vld [vmem:[%s678 + $0x78] sm:$0xff]
        %v695 = vld [vmem:[%s678 + $0x80] sm:$0xff]
        %v696 = vld [vmem:[%s678 + $0x88] sm:$0xff]
        %v697 = vld [vmem:[%s678 + $0x90] sm:$0xff]
        %v698 = vld [vmem:[%s678 + $0x98] sm:$0xff]
        %v699 = vld [vmem:[%s678 + $0xa0] sm:$0xff]
        %v700 = vld [vmem:[%s678 + $0xa8] sm:$0xff]
        %v701 = vld [vmem:[%s678 + $0xb0] sm:$0xff]
        %v702 = vld [vmem:[%s678 + $0xb8] sm:$0xff]
        %v703 = vld [vmem:[%s678 + $0xc0] sm:$0xff]
        %v704 = vld [vmem:[%s678 + $0xc8] sm:$0xff]
        %v705 = vld [vmem:[%s678 + $0xd0] sm:$0xff]
        %v706 = vld [vmem:[%s678 + $0xd8] sm:$0xff]
        %v707 = vld [vmem:[%s678 + $0xe0] sm:$0xff]
        %v708 = vld [vmem:[%s678 + $0xe8] sm:$0xff]
        %v709 = vld [vmem:[%s678 + $0xf0] sm:$0xff]
        %v710 = vld [vmem:[%s678 + $0xf8] sm:$0xff]
        %711 = vmatpush.msra.mxu0 %v709
        %712 = vmatpush.msra.mxu0 %v707
        %713 = vmatpush.msra.mxu0 %v705
        %714 = vmatpush.msra.mxu0 %v703
        %715 = vmatpush.msra.mxu0 %v701
        %716 = vmatpush.msra.mxu0 %v699
        %717 = vmatpush.msra.mxu0 %v697
        %718 = vmatpush.msra.mxu0 %v695
        %719 = vmatpush.msra.mxu0 %v693
        %720 = vmatpush.msra.mxu0 %v691
        %721 = vmatpush.msra.mxu0 %v689
        %722 = vmatpush.msra.mxu0 %v687
        %723 = vmatpush.msra.mxu0 %v685
        %724 = vmatpush.msra.mxu0 %v683
        %725 = vmatpush.msra.mxu0 %v681
        %726 = vmatpush.msra.mxu0 %v679
        %727 = vmatmul.f32.gmra.mxu0 %v667
        %v728 = vpop.f32.mrf.mxu0
        %v729 = vadd.f32 0.0, %v728
        %730 = vmatmul.f32.gmra.mxu0 %v670
        %v731 = vpop.f32.mrf.mxu0
        %v732 = vadd.f32 0.0, %v731
        %733 = vmatmul.f32.gmra.mxu0 %v673
        %v734 = vpop.f32.mrf.mxu0
        %v735 = vadd.f32 0.0, %v734
        %736 = vmatmul.f32.gmra.mxu0 %v676
        %v737 = vpop.f32.mrf.mxu0
        %v738 = vadd.f32 0.0, %v737
        %739 = vdwg.mxu0
        %740 = vmatpush.msra.mxu0 %v710
        %741 = vmatpush.msra.mxu0 %v708
        %742 = vmatpush.msra.mxu0 %v706
        %743 = vmatpush.msra.mxu0 %v704
        %744 = vmatpush.msra.mxu0 %v702
        %745 = vmatpush.msra.mxu0 %v700
        %746 = vmatpush.msra.mxu0 %v698
        %747 = vmatpush.msra.mxu0 %v696
        %748 = vmatpush.msra.mxu0 %v694
        %749 = vmatpush.msra.mxu0 %v692
        %750 = vmatpush.msra.mxu0 %v690
        %751 = vmatpush.msra.mxu0 %v688
        %752 = vmatpush.msra.mxu0 %v686
        %753 = vmatpush.msra.mxu0 %v684
        %754 = vmatpush.msra.mxu0 %v682
        %755 = vmatpush.msra.mxu0 %v680
        %756 = vmatmul.f32.gmra.mxu0 %v667
        %v757 = vpop.f32.mrf.mxu0
        %v758 = vadd.f32 0.0, %v757
        %759 = vmatmul.f32.gmra.mxu0 %v670
        %v760 = vpop.f32.mrf.mxu0
        %v761 = vadd.f32 0.0, %v760
        %762 = vmatmul.f32.gmra.mxu0 %v673
        %v763 = vpop.f32.mrf.mxu0
        %v764 = vadd.f32 0.0, %v763
        %765 = vmatmul.f32.gmra.mxu0 %v676
        %v766 = vpop.f32.mrf.mxu0
        %v767 = vadd.f32 0.0, %v766
        %768 = vdwg.mxu0
        %v769 = vadd.f32 %v592, %v729
        %v770 = vadd.f32 %v621, %v758
        %v771 = vadd.f32 %v595, %v732
        %v772 = vadd.f32 %v624, %v761
        %v773 = vadd.f32 %v598, %v735
        %v774 = vadd.f32 %v627, %v764
        %v775 = vadd.f32 %v601, %v738
        %v776 = vadd.f32 %v630, %v767
        %v777 = vmax.f32 %v769, 0.0
        %v778 = vmax.f32 %v770, 0.0
        %v779 = vmax.f32 %v771, 0.0
        %v780 = vmax.f32 %v772, 0.0
        %v781 = vmax.f32 %v773, 0.0
        %v782 = vmax.f32 %v774, 0.0
        %v783 = vmax.f32 %v775, 0.0
        %v784 = vmax.f32 %v776, 0.0
        %s785 = scalar_lea.vmem [#allocation6], 1024
        %v786 = vld [vmem:[%s785] sm:$0xff]
        %v787 = vld [vmem:[%s785 + $0x8] sm:$0xff]
        %v788 = vld [vmem:[%s785 + $0x10] sm:$0xff]
        %v789 = vld [vmem:[%s785 + $0x18] sm:$0xff]
        %v790 = vld [vmem:[%s785 + $0x20] sm:$0xff]
        %v791 = vld [vmem:[%s785 + $0x28] sm:$0xff]
        %v792 = vld [vmem:[%s785 + $0x30] sm:$0xff]
        %v793 = vld [vmem:[%s785 + $0x38] sm:$0xff]
        %v794 = vld [vmem:[%s785 + $0x40] sm:$0xff]
        %v795 = vld [vmem:[%s785 + $0x48] sm:$0xff]
        %v796 = vld [vmem:[%s785 + $0x50] sm:$0xff]
        %v797 = vld [vmem:[%s785 + $0x58] sm:$0xff]
        %v798 = vld [vmem:[%s785 + $0x60] sm:$0xff]
        %v799 = vld [vmem:[%s785 + $0x68] sm:$0xff]
        %v800 = vld [vmem:[%s785 + $0x70] sm:$0xff]
        %v801 = vld [vmem:[%s785 + $0x78] sm:$0xff]
        %v802 = vld [vmem:[%s785 + $0x80] sm:$0xff]
        %v803 = vld [vmem:[%s785 + $0x88] sm:$0xff]
        %v804 = vld [vmem:[%s785 + $0x90] sm:$0xff]
        %v805 = vld [vmem:[%s785 + $0x98] sm:$0xff]
        %v806 = vld [vmem:[%s785 + $0xa0] sm:$0xff]
        %v807 = vld [vmem:[%s785 + $0xa8] sm:$0xff]
        %v808 = vld [vmem:[%s785 + $0xb0] sm:$0xff]
        %v809 = vld [vmem:[%s785 + $0xb8] sm:$0xff]
        %v810 = vld [vmem:[%s785 + $0xc0] sm:$0xff]
        %v811 = vld [vmem:[%s785 + $0xc8] sm:$0xff]
        %v812 = vld [vmem:[%s785 + $0xd0] sm:$0xff]
        %v813 = vld [vmem:[%s785 + $0xd8] sm:$0xff]
        %v814 = vld [vmem:[%s785 + $0xe0] sm:$0xff]
        %v815 = vld [vmem:[%s785 + $0xe8] sm:$0xff]
        %v816 = vld [vmem:[%s785 + $0xf0] sm:$0xff]
        %v817 = vld [vmem:[%s785 + $0xf8] sm:$0xff]
        %v818 = vld [vmem:[%s785 + $0x100] sm:$0xff]
        %v819 = vld [vmem:[%s785 + $0x108] sm:$0xff]
        %v820 = vld [vmem:[%s785 + $0x110] sm:$0xff]
        %v821 = vld [vmem:[%s785 + $0x118] sm:$0xff]
        %v822 = vld [vmem:[%s785 + $0x120] sm:$0xff]
        %v823 = vld [vmem:[%s785 + $0x128] sm:$0xff]
        %v824 = vld [vmem:[%s785 + $0x130] sm:$0xff]
        %v825 = vld [vmem:[%s785 + $0x138] sm:$0xff]
        %v826 = vld [vmem:[%s785 + $0x140] sm:$0xff]
        %v827 = vld [vmem:[%s785 + $0x148] sm:$0xff]
        %v828 = vld [vmem:[%s785 + $0x150] sm:$0xff]
        %v829 = vld [vmem:[%s785 + $0x158] sm:$0xff]
        %v830 = vld [vmem:[%s785 + $0x160] sm:$0xff]
        %v831 = vld [vmem:[%s785 + $0x168] sm:$0xff]
        %v832 = vld [vmem:[%s785 + $0x170] sm:$0xff]
        %v833 = vld [vmem:[%s785 + $0x178] sm:$0xff]
        %v834 = vld [vmem:[%s785 + $0x180] sm:$0xff]
        %v835 = vld [vmem:[%s785 + $0x188] sm:$0xff]
        %v836 = vld [vmem:[%s785 + $0x190] sm:$0xff]
        %v837 = vld [vmem:[%s785 + $0x198] sm:$0xff]
        %v838 = vld [vmem:[%s785 + $0x1a0] sm:$0xff]
        %v839 = vld [vmem:[%s785 + $0x1a8] sm:$0xff]
        %v840 = vld [vmem:[%s785 + $0x1b0] sm:$0xff]
        %v841 = vld [vmem:[%s785 + $0x1b8] sm:$0xff]
        %v842 = vld [vmem:[%s785 + $0x1c0] sm:$0xff]
        %v843 = vld [vmem:[%s785 + $0x1c8] sm:$0xff]
        %v844 = vld [vmem:[%s785 + $0x1d0] sm:$0xff]
        %v845 = vld [vmem:[%s785 + $0x1d8] sm:$0xff]
        %v846 = vld [vmem:[%s785 + $0x1e0] sm:$0xff]
        %v847 = vld [vmem:[%s785 + $0x1e8] sm:$0xff]
        %v848 = vld [vmem:[%s785 + $0x1f0] sm:$0xff]
        %v849 = vld [vmem:[%s785 + $0x1f8] sm:$0xff]
        %v850 = vld [vmem:[%s785 + $0x200] sm:$0xff]
        %v851 = vld [vmem:[%s785 + $0x208] sm:$0xff]
        %v852 = vld [vmem:[%s785 + $0x210] sm:$0xff]
        %v853 = vld [vmem:[%s785 + $0x218] sm:$0xff]
        %v854 = vld [vmem:[%s785 + $0x220] sm:$0xff]
        %v855 = vld [vmem:[%s785 + $0x228] sm:$0xff]
        %v856 = vld [vmem:[%s785 + $0x230] sm:$0xff]
        %v857 = vld [vmem:[%s785 + $0x238] sm:$0xff]
        %v858 = vld [vmem:[%s785 + $0x240] sm:$0xff]
        %v859 = vld [vmem:[%s785 + $0x248] sm:$0xff]
        %v860 = vld [vmem:[%s785 + $0x250] sm:$0xff]
        %v861 = vld [vmem:[%s785 + $0x258] sm:$0xff]
        %v862 = vld [vmem:[%s785 + $0x260] sm:$0xff]
        %v863 = vld [vmem:[%s785 + $0x268] sm:$0xff]
        %v864 = vld [vmem:[%s785 + $0x270] sm:$0xff]
        %v865 = vld [vmem:[%s785 + $0x278] sm:$0xff]
        %v866 = vld [vmem:[%s785 + $0x280] sm:$0xff]
        %v867 = vld [vmem:[%s785 + $0x288] sm:$0xff]
        %v868 = vld [vmem:[%s785 + $0x290] sm:$0xff]
        %v869 = vld [vmem:[%s785 + $0x298] sm:$0xff]
        %v870 = vld [vmem:[%s785 + $0x2a0] sm:$0xff]
        %v871 = vld [vmem:[%s785 + $0x2a8] sm:$0xff]
        %v872 = vld [vmem:[%s785 + $0x2b0] sm:$0xff]
        %v873 = vld [vmem:[%s785 + $0x2b8] sm:$0xff]
        %v874 = vld [vmem:[%s785 + $0x2c0] sm:$0xff]
        %v875 = vld [vmem:[%s785 + $0x2c8] sm:$0xff]
        %v876 = vld [vmem:[%s785 + $0x2d0] sm:$0xff]
        %v877 = vld [vmem:[%s785 + $0x2d8] sm:$0xff]
        %v878 = vld [vmem:[%s785 + $0x2e0] sm:$0xff]
        %v879 = vld [vmem:[%s785 + $0x2e8] sm:$0xff]
        %v880 = vld [vmem:[%s785 + $0x2f0] sm:$0xff]
        %v881 = vld [vmem:[%s785 + $0x2f8] sm:$0xff]
        %v882 = vld [vmem:[%s785 + $0x300] sm:$0xff]
        %v883 = vld [vmem:[%s785 + $0x308] sm:$0xff]
        %v884 = vld [vmem:[%s785 + $0x310] sm:$0xff]
        %v885 = vld [vmem:[%s785 + $0x318] sm:$0xff]
        %v886 = vld [vmem:[%s785 + $0x320] sm:$0xff]
        %v887 = vld [vmem:[%s785 + $0x328] sm:$0xff]
        %v888 = vld [vmem:[%s785 + $0x330] sm:$0xff]
        %v889 = vld [vmem:[%s785 + $0x338] sm:$0xff]
        %v890 = vld [vmem:[%s785 + $0x340] sm:$0xff]
        %v891 = vld [vmem:[%s785 + $0x348] sm:$0xff]
        %v892 = vld [vmem:[%s785 + $0x350] sm:$0xff]
        %v893 = vld [vmem:[%s785 + $0x358] sm:$0xff]
        %v894 = vld [vmem:[%s785 + $0x360] sm:$0xff]
        %v895 = vld [vmem:[%s785 + $0x368] sm:$0xff]
        %v896 = vld [vmem:[%s785 + $0x370] sm:$0xff]
        %v897 = vld [vmem:[%s785 + $0x378] sm:$0xff]
        %v898 = vld [vmem:[%s785 + $0x380] sm:$0xff]
        %v899 = vld [vmem:[%s785 + $0x388] sm:$0xff]
        %v900 = vld [vmem:[%s785 + $0x390] sm:$0xff]
        %v901 = vld [vmem:[%s785 + $0x398] sm:$0xff]
        %v902 = vld [vmem:[%s785 + $0x3a0] sm:$0xff]
        %v903 = vld [vmem:[%s785 + $0x3a8] sm:$0xff]
        %v904 = vld [vmem:[%s785 + $0x3b0] sm:$0xff]
        %v905 = vld [vmem:[%s785 + $0x3b8] sm:$0xff]
        %v906 = vld [vmem:[%s785 + $0x3c0] sm:$0xff]
        %v907 = vld [vmem:[%s785 + $0x3c8] sm:$0xff]
        %v908 = vld [vmem:[%s785 + $0x3d0] sm:$0xff]
        %v909 = vld [vmem:[%s785 + $0x3d8] sm:$0xff]
        %v910 = vld [vmem:[%s785 + $0x3e0] sm:$0xff]
        %v911 = vld [vmem:[%s785 + $0x3e8] sm:$0xff]
        %v912 = vld [vmem:[%s785 + $0x3f0] sm:$0xff]
        %v913 = vld [vmem:[%s785 + $0x3f8] sm:$0xff]
        %v914 = vld [vmem:[#allocation7] sm:$0xff]
        %v915 = vld [vmem:[#allocation7 + $0x8] sm:$0xff]
        %v916 = vld [vmem:[#allocation7 + $0x10] sm:$0xff]
        %v917 = vld [vmem:[#allocation7 + $0x18] sm:$0xff]
        %vm918 = vcmask 261120
        %v920 = vsel %vm918, %v914, 0
        %v923 = vsel %vm918, %v915, 0
        %v926 = vsel %vm918, %v916, 0
        %v929 = vsel %vm918, %v917, 0
        %931 = vmatpush.msra.mxu0 0.0
        %932 = vmatpush.msra.mxu0 0.0
        %933 = vmatpush.msra.mxu0 0.0
        %934 = vmatpush.msra.mxu0 0.0
        %935 = vmatpush.msra.mxu0 0.0
        %936 = vmatpush.msra.mxu0 0.0
        %937 = vmatpush.msra.mxu0 0.0
        %938 = vmatpush.msra.mxu0 0.0
        %939 = vmatpush.msra.mxu0 0.0
        %940 = vmatpush.msra.mxu0 0.0
        %941 = vmatpush.msra.mxu0 0.0
        %942 = vmatpush.msra.mxu0 0.0
        %943 = vmatpush.msra.mxu0 %v783
        %944 = vmatpush.msra.mxu0 %v781
        %945 = vmatpush.msra.mxu0 %v779
        %946 = vmatpush.msra.mxu0 %v777
        %947 = vmatmul.f32.gmra.mxu0 %v920
        %v948 = vpop.f32.mrf.mxu0
        %v949 = vadd.f32 0.0, %v948
        %950 = vmatmul.f32.gmra.mxu0 %v923
        %v951 = vpop.f32.mrf.mxu0
        %v952 = vadd.f32 0.0, %v951
        %953 = vmatmul.f32.gmra.mxu0 %v926
        %v954 = vpop.f32.mrf.mxu0
        %v955 = vadd.f32 0.0, %v954
        %956 = vmatmul.f32.gmra.mxu0 %v929
        %v957 = vpop.f32.mrf.mxu0
        %v958 = vadd.f32 0.0, %v957
        %959 = vdwg.mxu0
        %960 = vmatpush.msra.mxu0 0.0
        %961 = vmatpush.msra.mxu0 0.0
        %962 = vmatpush.msra.mxu0 0.0
        %963 = vmatpush.msra.mxu0 0.0
        %964 = vmatpush.msra.mxu0 0.0
        %965 = vmatpush.msra.mxu0 0.0
        %966 = vmatpush.msra.mxu0 0.0
        %967 = vmatpush.msra.mxu0 0.0
        %968 = vmatpush.msra.mxu0 0.0
        %969 = vmatpush.msra.mxu0 0.0
        %970 = vmatpush.msra.mxu0 0.0
        %971 = vmatpush.msra.mxu0 0.0
        %972 = vmatpush.msra.mxu0 %v784
        %973 = vmatpush.msra.mxu0 %v782
        %974 = vmatpush.msra.mxu0 %v780
        %975 = vmatpush.msra.mxu0 %v778
        %976 = vmatmul.f32.gmra.mxu0 %v920
        %v977 = vpop.f32.mrf.mxu0
        %v978 = vadd.f32 0.0, %v977
        %979 = vmatmul.f32.gmra.mxu0 %v923
        %v980 = vpop.f32.mrf.mxu0
        %v981 = vadd.f32 0.0, %v980
        %982 = vmatmul.f32.gmra.mxu0 %v926
        %v983 = vpop.f32.mrf.mxu0
        %v984 = vadd.f32 0.0, %v983
        %985 = vmatmul.f32.gmra.mxu0 %v929
        %v986 = vpop.f32.mrf.mxu0
        %v987 = vadd.f32 0.0, %v986
        %988 = vdwg.mxu0
        %v989 = vld [vmem:[#allocation6] sm:$0xff]
        %v990 = vld [vmem:[#allocation6 + $0x8] sm:$0xff]
        %v991 = vld [vmem:[#allocation6 + $0x10] sm:$0xff]
        %v992 = vld [vmem:[#allocation6 + $0x18] sm:$0xff]
        %v993 = vld [vmem:[#allocation6 + $0x20] sm:$0xff]
        %v994 = vld [vmem:[#allocation6 + $0x28] sm:$0xff]
        %v995 = vld [vmem:[#allocation6 + $0x30] sm:$0xff]
        %v996 = vld [vmem:[#allocation6 + $0x38] sm:$0xff]
        %v997 = vld [vmem:[#allocation6 + $0x40] sm:$0xff]
        %v998 = vld [vmem:[#allocation6 + $0x48] sm:$0xff]
        %v999 = vld [vmem:[#allocation6 + $0x50] sm:$0xff]
        %v1000 = vld [vmem:[#allocation6 + $0x58] sm:$0xff]
        %v1001 = vld [vmem:[#allocation6 + $0x60] sm:$0xff]
        %v1002 = vld [vmem:[#allocation6 + $0x68] sm:$0xff]
        %v1003 = vld [vmem:[#allocation6 + $0x70] sm:$0xff]
        %v1004 = vld [vmem:[#allocation6 + $0x78] sm:$0xff]
        %v1005 = vld [vmem:[#allocation6 + $0x80] sm:$0xff]
        %v1006 = vld [vmem:[#allocation6 + $0x88] sm:$0xff]
        %v1007 = vld [vmem:[#allocation6 + $0x90] sm:$0xff]
        %v1008 = vld [vmem:[#allocation6 + $0x98] sm:$0xff]
        %v1009 = vld [vmem:[#allocation6 + $0xa0] sm:$0xff]
        %v1010 = vld [vmem:[#allocation6 + $0xa8] sm:$0xff]
        %v1011 = vld [vmem:[#allocation6 + $0xb0] sm:$0xff]
        %v1012 = vld [vmem:[#allocation6 + $0xb8] sm:$0xff]
        %v1013 = vld [vmem:[#allocation6 + $0xc0] sm:$0xff]
        %v1014 = vld [vmem:[#allocation6 + $0xc8] sm:$0xff]
        %v1015 = vld [vmem:[#allocation6 + $0xd0] sm:$0xff]
        %v1016 = vld [vmem:[#allocation6 + $0xd8] sm:$0xff]
        %v1017 = vld [vmem:[#allocation6 + $0xe0] sm:$0xff]
        %v1018 = vld [vmem:[#allocation6 + $0xe8] sm:$0xff]
        %v1019 = vld [vmem:[#allocation6 + $0xf0] sm:$0xff]
        %v1020 = vld [vmem:[#allocation6 + $0xf8] sm:$0xff]
        %v1021 = vld [vmem:[#allocation6 + $0x100] sm:$0xff]
        %v1022 = vld [vmem:[#allocation6 + $0x108] sm:$0xff]
        %v1023 = vld [vmem:[#allocation6 + $0x110] sm:$0xff]
        %v1024 = vld [vmem:[#allocation6 + $0x118] sm:$0xff]
        %v1025 = vld [vmem:[#allocation6 + $0x120] sm:$0xff]
        %v1026 = vld [vmem:[#allocation6 + $0x128] sm:$0xff]
        %v1027 = vld [vmem:[#allocation6 + $0x130] sm:$0xff]
        %v1028 = vld [vmem:[#allocation6 + $0x138] sm:$0xff]
        %v1029 = vld [vmem:[#allocation6 + $0x140] sm:$0xff]
        %v1030 = vld [vmem:[#allocation6 + $0x148] sm:$0xff]
        %v1031 = vld [vmem:[#allocation6 + $0x150] sm:$0xff]
        %v1032 = vld [vmem:[#allocation6 + $0x158] sm:$0xff]
        %v1033 = vld [vmem:[#allocation6 + $0x160] sm:$0xff]
        %v1034 = vld [vmem:[#allocation6 + $0x168] sm:$0xff]
        %v1035 = vld [vmem:[#allocation6 + $0x170] sm:$0xff]
        %v1036 = vld [vmem:[#allocation6 + $0x178] sm:$0xff]
        %v1037 = vld [vmem:[#allocation6 + $0x180] sm:$0xff]
        %v1038 = vld [vmem:[#allocation6 + $0x188] sm:$0xff]
        %v1039 = vld [vmem:[#allocation6 + $0x190] sm:$0xff]
        %v1040 = vld [vmem:[#allocation6 + $0x198] sm:$0xff]
        %v1041 = vld [vmem:[#allocation6 + $0x1a0] sm:$0xff]
        %v1042 = vld [vmem:[#allocation6 + $0x1a8] sm:$0xff]
        %v1043 = vld [vmem:[#allocation6 + $0x1b0] sm:$0xff]
        %v1044 = vld [vmem:[#allocation6 + $0x1b8] sm:$0xff]
        %v1045 = vld [vmem:[#allocation6 + $0x1c0] sm:$0xff]
        %v1046 = vld [vmem:[#allocation6 + $0x1c8] sm:$0xff]
        %v1047 = vld [vmem:[#allocation6 + $0x1d0] sm:$0xff]
        %v1048 = vld [vmem:[#allocation6 + $0x1d8] sm:$0xff]
        %v1049 = vld [vmem:[#allocation6 + $0x1e0] sm:$0xff]
        %v1050 = vld [vmem:[#allocation6 + $0x1e8] sm:$0xff]
        %v1051 = vld [vmem:[#allocation6 + $0x1f0] sm:$0xff]
        %v1052 = vld [vmem:[#allocation6 + $0x1f8] sm:$0xff]
        %v1053 = vld [vmem:[#allocation6 + $0x200] sm:$0xff]
        %v1054 = vld [vmem:[#allocation6 + $0x208] sm:$0xff]
        %v1055 = vld [vmem:[#allocation6 + $0x210] sm:$0xff]
        %v1056 = vld [vmem:[#allocation6 + $0x218] sm:$0xff]
        %v1057 = vld [vmem:[#allocation6 + $0x220] sm:$0xff]
        %v1058 = vld [vmem:[#allocation6 + $0x228] sm:$0xff]
        %v1059 = vld [vmem:[#allocation6 + $0x230] sm:$0xff]
        %v1060 = vld [vmem:[#allocation6 + $0x238] sm:$0xff]
        %v1061 = vld [vmem:[#allocation6 + $0x240] sm:$0xff]
        %v1062 = vld [vmem:[#allocation6 + $0x248] sm:$0xff]
        %v1063 = vld [vmem:[#allocation6 + $0x250] sm:$0xff]
        %v1064 = vld [vmem:[#allocation6 + $0x258] sm:$0xff]
        %v1065 = vld [vmem:[#allocation6 + $0x260] sm:$0xff]
        %v1066 = vld [vmem:[#allocation6 + $0x268] sm:$0xff]
        %v1067 = vld [vmem:[#allocation6 + $0x270] sm:$0xff]
        %v1068 = vld [vmem:[#allocation6 + $0x278] sm:$0xff]
        %v1069 = vld [vmem:[#allocation6 + $0x280] sm:$0xff]
        %v1070 = vld [vmem:[#allocation6 + $0x288] sm:$0xff]
        %v1071 = vld [vmem:[#allocation6 + $0x290] sm:$0xff]
        %v1072 = vld [vmem:[#allocation6 + $0x298] sm:$0xff]
        %v1073 = vld [vmem:[#allocation6 + $0x2a0] sm:$0xff]
        %v1074 = vld [vmem:[#allocation6 + $0x2a8] sm:$0xff]
        %v1075 = vld [vmem:[#allocation6 + $0x2b0] sm:$0xff]
        %v1076 = vld [vmem:[#allocation6 + $0x2b8] sm:$0xff]
        %v1077 = vld [vmem:[#allocation6 + $0x2c0] sm:$0xff]
        %v1078 = vld [vmem:[#allocation6 + $0x2c8] sm:$0xff]
        %v1079 = vld [vmem:[#allocation6 + $0x2d0] sm:$0xff]
        %v1080 = vld [vmem:[#allocation6 + $0x2d8] sm:$0xff]
        %v1081 = vld [vmem:[#allocation6 + $0x2e0] sm:$0xff]
        %v1082 = vld [vmem:[#allocation6 + $0x2e8] sm:$0xff]
        %v1083 = vld [vmem:[#allocation6 + $0x2f0] sm:$0xff]
        %v1084 = vld [vmem:[#allocation6 + $0x2f8] sm:$0xff]
        %v1085 = vld [vmem:[#allocation6 + $0x300] sm:$0xff]
        %v1086 = vld [vmem:[#allocation6 + $0x308] sm:$0xff]
        %v1087 = vld [vmem:[#allocation6 + $0x310] sm:$0xff]
        %v1088 = vld [vmem:[#allocation6 + $0x318] sm:$0xff]
        %v1089 = vld [vmem:[#allocation6 + $0x320] sm:$0xff]
        %v1090 = vld [vmem:[#allocation6 + $0x328] sm:$0xff]
        %v1091 = vld [vmem:[#allocation6 + $0x330] sm:$0xff]
        %v1092 = vld [vmem:[#allocation6 + $0x338] sm:$0xff]
        %v1093 = vld [vmem:[#allocation6 + $0x340] sm:$0xff]
        %v1094 = vld [vmem:[#allocation6 + $0x348] sm:$0xff]
        %v1095 = vld [vmem:[#allocation6 + $0x350] sm:$0xff]
        %v1096 = vld [vmem:[#allocation6 + $0x358] sm:$0xff]
        %v1097 = vld [vmem:[#allocation6 + $0x360] sm:$0xff]
        %v1098 = vld [vmem:[#allocation6 + $0x368] sm:$0xff]
        %v1099 = vld [vmem:[#allocation6 + $0x370] sm:$0xff]
        %v1100 = vld [vmem:[#allocation6 + $0x378] sm:$0xff]
        %v1101 = vld [vmem:[#allocation6 + $0x380] sm:$0xff]
        %v1102 = vld [vmem:[#allocation6 + $0x388] sm:$0xff]
        %v1103 = vld [vmem:[#allocation6 + $0x390] sm:$0xff]
        %v1104 = vld [vmem:[#allocation6 + $0x398] sm:$0xff]
        %v1105 = vld [vmem:[#allocation6 + $0x3a0] sm:$0xff]
        %v1106 = vld [vmem:[#allocation6 + $0x3a8] sm:$0xff]
        %v1107 = vld [vmem:[#allocation6 + $0x3b0] sm:$0xff]
        %v1108 = vld [vmem:[#allocation6 + $0x3b8] sm:$0xff]
        %v1109 = vld [vmem:[#allocation6 + $0x3c0] sm:$0xff]
        %v1110 = vld [vmem:[#allocation6 + $0x3c8] sm:$0xff]
        %v1111 = vld [vmem:[#allocation6 + $0x3d0] sm:$0xff]
        %v1112 = vld [vmem:[#allocation6 + $0x3d8] sm:$0xff]
        %v1113 = vld [vmem:[#allocation6 + $0x3e0] sm:$0xff]
        %v1114 = vld [vmem:[#allocation6 + $0x3e8] sm:$0xff]
        %v1115 = vld [vmem:[#allocation6 + $0x3f0] sm:$0xff]
        %v1116 = vld [vmem:[#allocation6 + $0x3f8] sm:$0xff]
        %1117 = vmatpush.msra.mxu0 %v1049
        %1118 = vmatpush.msra.mxu0 %v1045
        %1119 = vmatpush.msra.mxu0 %v1041
        %1120 = vmatpush.msra.mxu0 %v1037
        %1121 = vmatpush.msra.mxu0 %v1033
        %1122 = vmatpush.msra.mxu0 %v1029
        %1123 = vmatpush.msra.mxu0 %v1025
        %1124 = vmatpush.msra.mxu0 %v1021
        %1125 = vmatpush.msra.mxu0 %v1017
        %1126 = vmatpush.msra.mxu0 %v1013
        %1127 = vmatpush.msra.mxu0 %v1009
        %1128 = vmatpush.msra.mxu0 %v1005
        %1129 = vmatpush.msra.mxu0 %v1001
        %1130 = vmatpush.msra.mxu0 %v997
        %1131 = vmatpush.msra.mxu0 %v993
        %1132 = vmatpush.msra.mxu0 %v989
        %1133 = vmatmul.f32.gmra.mxu0 %v949
        %v1134 = vpop.f32.mrf.mxu0
        %v1135 = vadd.f32 0.0, %v1134
        %1136 = vmatmul.f32.gmra.mxu0 %v952
        %v1137 = vpop.f32.mrf.mxu0
        %v1138 = vadd.f32 0.0, %v1137
        %1139 = vmatmul.f32.gmra.mxu0 %v955
        %v1140 = vpop.f32.mrf.mxu0
        %v1141 = vadd.f32 0.0, %v1140
        %1142 = vmatmul.f32.gmra.mxu0 %v958
        %v1143 = vpop.f32.mrf.mxu0
        %v1144 = vadd.f32 0.0, %v1143
        %1145 = vdwg.mxu0
        %1146 = vmatpush.msra.mxu0 %v1113
        %1147 = vmatpush.msra.mxu0 %v1109
        %1148 = vmatpush.msra.mxu0 %v1105
        %1149 = vmatpush.msra.mxu0 %v1101
        %1150 = vmatpush.msra.mxu0 %v1097
        %1151 = vmatpush.msra.mxu0 %v1093
        %1152 = vmatpush.msra.mxu0 %v1089
        %1153 = vmatpush.msra.mxu0 %v1085
        %1154 = vmatpush.msra.mxu0 %v1081
        %1155 = vmatpush.msra.mxu0 %v1077
        %1156 = vmatpush.msra.mxu0 %v1073
        %1157 = vmatpush.msra.mxu0 %v1069
        %1158 = vmatpush.msra.mxu0 %v1065
        %1159 = vmatpush.msra.mxu0 %v1061
        %1160 = vmatpush.msra.mxu0 %v1057
        %1161 = vmatpush.msra.mxu0 %v1053
        %1162 = vmatmul.f32.gmra.mxu0 %v978
        %v1163 = vpop.f32.mrf.mxu0
        %v1164 = vadd.f32 %v1135, %v1163
        %1165 = vmatmul.f32.gmra.mxu0 %v981
        %v1166 = vpop.f32.mrf.mxu0
        %v1167 = vadd.f32 %v1138, %v1166
        %1168 = vmatmul.f32.gmra.mxu0 %v984
        %v1169 = vpop.f32.mrf.mxu0
        %v1170 = vadd.f32 %v1141, %v1169
        %1171 = vmatmul.f32.gmra.mxu0 %v987
        %v1172 = vpop.f32.mrf.mxu0
        %v1173 = vadd.f32 %v1144, %v1172
        %1174 = vdwg.mxu0
        %1175 = vmatpush.msra.mxu0 %v1050
        %1176 = vmatpush.msra.mxu0 %v1046
        %1177 = vmatpush.msra.mxu0 %v1042
        %1178 = vmatpush.msra.mxu0 %v1038
        %1179 = vmatpush.msra.mxu0 %v1034
        %1180 = vmatpush.msra.mxu0 %v1030
        %1181 = vmatpush.msra.mxu0 %v1026
        %1182 = vmatpush.msra.mxu0 %v1022
        %1183 = vmatpush.msra.mxu0 %v1018
        %1184 = vmatpush.msra.mxu0 %v1014
        %1185 = vmatpush.msra.mxu0 %v1010
        %1186 = vmatpush.msra.mxu0 %v1006
        %1187 = vmatpush.msra.mxu0 %v1002
        %1188 = vmatpush.msra.mxu0 %v998
        %1189 = vmatpush.msra.mxu0 %v994
        %1190 = vmatpush.msra.mxu0 %v990
        %1191 = vmatmul.f32.gmra.mxu0 %v949
        %v1192 = vpop.f32.mrf.mxu0
        %v1193 = vadd.f32 0.0, %v1192
        %1194 = vmatmul.f32.gmra.mxu0 %v952
        %v1195 = vpop.f32.mrf.mxu0
        %v1196 = vadd.f32 0.0, %v1195
        %1197 = vmatmul.f32.gmra.mxu0 %v955
        %v1198 = vpop.f32.mrf.mxu0
        %v1199 = vadd.f32 0.0, %v1198
        %1200 = vmatmul.f32.gmra.mxu0 %v958
        %v1201 = vpop.f32.mrf.mxu0
        %v1202 = vadd.f32 0.0, %v1201
        %1203 = vdwg.mxu0
        %1204 = vmatpush.msra.mxu0 %v1114
        %1205 = vmatpush.msra.mxu0 %v1110
        %1206 = vmatpush.msra.mxu0 %v1106
        %1207 = vmatpush.msra.mxu0 %v1102
        %1208 = vmatpush.msra.mxu0 %v1098
        %1209 = vmatpush.msra.mxu0 %v1094
        %1210 = vmatpush.msra.mxu0 %v1090
        %1211 = vmatpush.msra.mxu0 %v1086
        %1212 = vmatpush.msra.mxu0 %v1082
        %1213 = vmatpush.msra.mxu0 %v1078
        %1214 = vmatpush.msra.mxu0 %v1074
        %1215 = vmatpush.msra.mxu0 %v1070
        %1216 = vmatpush.msra.mxu0 %v1066
        %1217 = vmatpush.msra.mxu0 %v1062
        %1218 = vmatpush.msra.mxu0 %v1058
        %1219 = vmatpush.msra.mxu0 %v1054
        %1220 = vmatmul.f32.gmra.mxu0 %v978
        %v1221 = vpop.f32.mrf.mxu0
        %v1222 = vadd.f32 %v1193, %v1221
        %1223 = vmatmul.f32.gmra.mxu0 %v981
        %v1224 = vpop.f32.mrf.mxu0
        %v1225 = vadd.f32 %v1196, %v1224
        %1226 = vmatmul.f32.gmra.mxu0 %v984
        %v1227 = vpop.f32.mrf.mxu0
        %v1228 = vadd.f32 %v1199, %v1227
        %1229 = vmatmul.f32.gmra.mxu0 %v987
        %v1230 = vpop.f32.mrf.mxu0
        %v1231 = vadd.f32 %v1202, %v1230
        %1232 = vdwg.mxu0
        %1233 = vmatpush.msra.mxu0 %v1051
        %1234 = vmatpush.msra.mxu0 %v1047
        %1235 = vmatpush.msra.mxu0 %v1043
        %1236 = vmatpush.msra.mxu0 %v1039
        %1237 = vmatpush.msra.mxu0 %v1035
        %1238 = vmatpush.msra.mxu0 %v1031
        %1239 = vmatpush.msra.mxu0 %v1027
        %1240 = vmatpush.msra.mxu0 %v1023
        %1241 = vmatpush.msra.mxu0 %v1019
        %1242 = vmatpush.msra.mxu0 %v1015
        %1243 = vmatpush.msra.mxu0 %v1011
        %1244 = vmatpush.msra.mxu0 %v1007
        %1245 = vmatpush.msra.mxu0 %v1003
        %1246 = vmatpush.msra.mxu0 %v999
        %1247 = vmatpush.msra.mxu0 %v995
        %1248 = vmatpush.msra.mxu0 %v991
        %1249 = vmatmul.f32.gmra.mxu0 %v949
        %v1250 = vpop.f32.mrf.mxu0
        %v1251 = vadd.f32 0.0, %v1250
        %1252 = vmatmul.f32.gmra.mxu0 %v952
        %v1253 = vpop.f32.mrf.mxu0
        %v1254 = vadd.f32 0.0, %v1253
        %1255 = vmatmul.f32.gmra.mxu0 %v955
        %v1256 = vpop.f32.mrf.mxu0
        %v1257 = vadd.f32 0.0, %v1256
        %1258 = vmatmul.f32.gmra.mxu0 %v958
        %v1259 = vpop.f32.mrf.mxu0
        %v1260 = vadd.f32 0.0, %v1259
        %1261 = vdwg.mxu0
        %1262 = vmatpush.msra.mxu0 %v1115
        %1263 = vmatpush.msra.mxu0 %v1111
        %1264 = vmatpush.msra.mxu0 %v1107
        %1265 = vmatpush.msra.mxu0 %v1103
        %1266 = vmatpush.msra.mxu0 %v1099
        %1267 = vmatpush.msra.mxu0 %v1095
        %1268 = vmatpush.msra.mxu0 %v1091
        %1269 = vmatpush.msra.mxu0 %v1087
        %1270 = vmatpush.msra.mxu0 %v1083
        %1271 = vmatpush.msra.mxu0 %v1079
        %1272 = vmatpush.msra.mxu0 %v1075
        %1273 = vmatpush.msra.mxu0 %v1071
        %1274 = vmatpush.msra.mxu0 %v1067
        %1275 = vmatpush.msra.mxu0 %v1063
        %1276 = vmatpush.msra.mxu0 %v1059
        %1277 = vmatpush.msra.mxu0 %v1055
        %1278 = vmatmul.f32.gmra.mxu0 %v978
        %v1279 = vpop.f32.mrf.mxu0
        %v1280 = vadd.f32 %v1251, %v1279
        %1281 = vmatmul.f32.gmra.mxu0 %v981
        %v1282 = vpop.f32.mrf.mxu0
        %v1283 = vadd.f32 %v1254, %v1282
        %1284 = vmatmul.f32.gmra.mxu0 %v984
        %v1285 = vpop.f32.mrf.mxu0
        %v1286 = vadd.f32 %v1257, %v1285
        %1287 = vmatmul.f32.gmra.mxu0 %v987
        %v1288 = vpop.f32.mrf.mxu0
        %v1289 = vadd.f32 %v1260, %v1288
        %1290 = vdwg.mxu0
        %1291 = vmatpush.msra.mxu0 %v1052
        %1292 = vmatpush.msra.mxu0 %v1048
        %1293 = vmatpush.msra.mxu0 %v1044
        %1294 = vmatpush.msra.mxu0 %v1040
        %1295 = vmatpush.msra.mxu0 %v1036
        %1296 = vmatpush.msra.mxu0 %v1032
        %1297 = vmatpush.msra.mxu0 %v1028
        %1298 = vmatpush.msra.mxu0 %v1024
        %1299 = vmatpush.msra.mxu0 %v1020
        %1300 = vmatpush.msra.mxu0 %v1016
        %1301 = vmatpush.msra.mxu0 %v1012
        %1302 = vmatpush.msra.mxu0 %v1008
        %1303 = vmatpush.msra.mxu0 %v1004
        %1304 = vmatpush.msra.mxu0 %v1000
        %1305 = vmatpush.msra.mxu0 %v996
        %1306 = vmatpush.msra.mxu0 %v992
        %1307 = vmatmul.f32.gmra.mxu0 %v949
        %v1308 = vpop.f32.mrf.mxu0
        %v1309 = vadd.f32 0.0, %v1308
        %1310 = vmatmul.f32.gmra.mxu0 %v952
        %v1311 = vpop.f32.mrf.mxu0
        %v1312 = vadd.f32 0.0, %v1311
        %1313 = vmatmul.f32.gmra.mxu0 %v955
        %v1314 = vpop.f32.mrf.mxu0
        %v1315 = vadd.f32 0.0, %v1314
        %1316 = vmatmul.f32.gmra.mxu0 %v958
        %v1317 = vpop.f32.mrf.mxu0
        %v1318 = vadd.f32 0.0, %v1317
        %1319 = vdwg.mxu0
        %1320 = vmatpush.msra.mxu0 %v1116
        %1321 = vmatpush.msra.mxu0 %v1112
        %1322 = vmatpush.msra.mxu0 %v1108
        %1323 = vmatpush.msra.mxu0 %v1104
        %1324 = vmatpush.msra.mxu0 %v1100
        %1325 = vmatpush.msra.mxu0 %v1096
        %1326 = vmatpush.msra.mxu0 %v1092
        %1327 = vmatpush.msra.mxu0 %v1088
        %1328 = vmatpush.msra.mxu0 %v1084
        %1329 = vmatpush.msra.mxu0 %v1080
        %1330 = vmatpush.msra.mxu0 %v1076
        %1331 = vmatpush.msra.mxu0 %v1072
        %1332 = vmatpush.msra.mxu0 %v1068
        %1333 = vmatpush.msra.mxu0 %v1064
        %1334 = vmatpush.msra.mxu0 %v1060
        %1335 = vmatpush.msra.mxu0 %v1056
        %1336 = vmatmul.f32.gmra.mxu0 %v978
        %v1337 = vpop.f32.mrf.mxu0
        %v1338 = vadd.f32 %v1309, %v1337
        %1339 = vmatmul.f32.gmra.mxu0 %v981
        %v1340 = vpop.f32.mrf.mxu0
        %v1341 = vadd.f32 %v1312, %v1340
        %1342 = vmatmul.f32.gmra.mxu0 %v984
        %v1343 = vpop.f32.mrf.mxu0
        %v1344 = vadd.f32 %v1315, %v1343
        %1345 = vmatmul.f32.gmra.mxu0 %v987
        %v1346 = vpop.f32.mrf.mxu0
        %v1347 = vadd.f32 %v1318, %v1346
        %1348 = vdwg.mxu0
        %1349 = vmatpush.msra.mxu0 %v846
        %1350 = vmatpush.msra.mxu0 %v842
        %1351 = vmatpush.msra.mxu0 %v838
        %1352 = vmatpush.msra.mxu0 %v834
        %1353 = vmatpush.msra.mxu0 %v830
        %1354 = vmatpush.msra.mxu0 %v826
        %1355 = vmatpush.msra.mxu0 %v822
        %1356 = vmatpush.msra.mxu0 %v818
        %1357 = vmatpush.msra.mxu0 %v814
        %1358 = vmatpush.msra.mxu0 %v810
        %1359 = vmatpush.msra.mxu0 %v806
        %1360 = vmatpush.msra.mxu0 %v802
        %1361 = vmatpush.msra.mxu0 %v798
        %1362 = vmatpush.msra.mxu0 %v794
        %1363 = vmatpush.msra.mxu0 %v790
        %1364 = vmatpush.msra.mxu0 %v786
        %1365 = vmatmul.f32.gmra.mxu0 %v777
        %v1366 = vpop.f32.mrf.mxu0
        %v1367 = vadd.f32 %v1164, %v1366
        %1368 = vmatmul.f32.gmra.mxu0 %v779
        %v1369 = vpop.f32.mrf.mxu0
        %v1370 = vadd.f32 %v1167, %v1369
        %1371 = vmatmul.f32.gmra.mxu0 %v781
        %v1372 = vpop.f32.mrf.mxu0
        %v1373 = vadd.f32 %v1170, %v1372
        %1374 = vmatmul.f32.gmra.mxu0 %v783
        %v1375 = vpop.f32.mrf.mxu0
        %v1376 = vadd.f32 %v1173, %v1375
        %1377 = vdwg.mxu0
        %1378 = vmatpush.msra.mxu0 %v910
        %1379 = vmatpush.msra.mxu0 %v906
        %1380 = vmatpush.msra.mxu0 %v902
        %1381 = vmatpush.msra.mxu0 %v898
        %1382 = vmatpush.msra.mxu0 %v894
        %1383 = vmatpush.msra.mxu0 %v890
        %1384 = vmatpush.msra.mxu0 %v886
        %1385 = vmatpush.msra.mxu0 %v882
        %1386 = vmatpush.msra.mxu0 %v878
        %1387 = vmatpush.msra.mxu0 %v874
        %1388 = vmatpush.msra.mxu0 %v870
        %1389 = vmatpush.msra.mxu0 %v866
        %1390 = vmatpush.msra.mxu0 %v862
        %1391 = vmatpush.msra.mxu0 %v858
        %1392 = vmatpush.msra.mxu0 %v854
        %1393 = vmatpush.msra.mxu0 %v850
        %1394 = vmatmul.f32.gmra.mxu0 %v778
        %v1395 = vpop.f32.mrf.mxu0
        %v1396 = vadd.f32 %v1367, %v1395
        %1397 = vmatmul.f32.gmra.mxu0 %v780
        %v1398 = vpop.f32.mrf.mxu0
        %v1399 = vadd.f32 %v1370, %v1398
        %1400 = vmatmul.f32.gmra.mxu0 %v782
        %v1401 = vpop.f32.mrf.mxu0
        %v1402 = vadd.f32 %v1373, %v1401
        %1403 = vmatmul.f32.gmra.mxu0 %v784
        %v1404 = vpop.f32.mrf.mxu0
        %v1405 = vadd.f32 %v1376, %v1404
        %1406 = vdwg.mxu0
        %1407 = vmatpush.msra.mxu0 %v847
        %1408 = vmatpush.msra.mxu0 %v843
        %1409 = vmatpush.msra.mxu0 %v839
        %1410 = vmatpush.msra.mxu0 %v835
        %1411 = vmatpush.msra.mxu0 %v831
        %1412 = vmatpush.msra.mxu0 %v827
        %1413 = vmatpush.msra.mxu0 %v823
        %1414 = vmatpush.msra.mxu0 %v819
        %1415 = vmatpush.msra.mxu0 %v815
        %1416 = vmatpush.msra.mxu0 %v811
        %1417 = vmatpush.msra.mxu0 %v807
        %1418 = vmatpush.msra.mxu0 %v803
        %1419 = vmatpush.msra.mxu0 %v799
        %1420 = vmatpush.msra.mxu0 %v795
        %1421 = vmatpush.msra.mxu0 %v791
        %1422 = vmatpush.msra.mxu0 %v787
        %1423 = vmatmul.f32.gmra.mxu0 %v777
        %v1424 = vpop.f32.mrf.mxu0
        %v1425 = vadd.f32 %v1222, %v1424
        %1426 = vmatmul.f32.gmra.mxu0 %v779
        %v1427 = vpop.f32.mrf.mxu0
        %v1428 = vadd.f32 %v1225, %v1427
        %1429 = vmatmul.f32.gmra.mxu0 %v781
        %v1430 = vpop.f32.mrf.mxu0
        %v1431 = vadd.f32 %v1228, %v1430
        %1432 = vmatmul.f32.gmra.mxu0 %v783
        %v1433 = vpop.f32.mrf.mxu0
        %v1434 = vadd.f32 %v1231, %v1433
        %1435 = vdwg.mxu0
        %1436 = vmatpush.msra.mxu0 %v911
        %1437 = vmatpush.msra.mxu0 %v907
        %1438 = vmatpush.msra.mxu0 %v903
        %1439 = vmatpush.msra.mxu0 %v899
        %1440 = vmatpush.msra.mxu0 %v895
        %1441 = vmatpush.msra.mxu0 %v891
        %1442 = vmatpush.msra.mxu0 %v887
        %1443 = vmatpush.msra.mxu0 %v883
        %1444 = vmatpush.msra.mxu0 %v879
        %1445 = vmatpush.msra.mxu0 %v875
        %1446 = vmatpush.msra.mxu0 %v871
        %1447 = vmatpush.msra.mxu0 %v867
        %1448 = vmatpush.msra.mxu0 %v863
        %1449 = vmatpush.msra.mxu0 %v859
        %1450 = vmatpush.msra.mxu0 %v855
        %1451 = vmatpush.msra.mxu0 %v851
        %1452 = vmatmul.f32.gmra.mxu0 %v778
        %v1453 = vpop.f32.mrf.mxu0
        %v1454 = vadd.f32 %v1425, %v1453
        %1455 = vmatmul.f32.gmra.mxu0 %v780
        %v1456 = vpop.f32.mrf.mxu0
        %v1457 = vadd.f32 %v1428, %v1456
        %1458 = vmatmul.f32.gmra.mxu0 %v782
        %v1459 = vpop.f32.mrf.mxu0
        %v1460 = vadd.f32 %v1431, %v1459
        %1461 = vmatmul.f32.gmra.mxu0 %v784
        %v1462 = vpop.f32.mrf.mxu0
        %v1463 = vadd.f32 %v1434, %v1462
        %1464 = vdwg.mxu0
        %1465 = vmatpush.msra.mxu0 %v848
        %1466 = vmatpush.msra.mxu0 %v844
        %1467 = vmatpush.msra.mxu0 %v840
        %1468 = vmatpush.msra.mxu0 %v836
        %1469 = vmatpush.msra.mxu0 %v832
        %1470 = vmatpush.msra.mxu0 %v828
        %1471 = vmatpush.msra.mxu0 %v824
        %1472 = vmatpush.msra.mxu0 %v820
        %1473 = vmatpush.msra.mxu0 %v816
        %1474 = vmatpush.msra.mxu0 %v812
        %1475 = vmatpush.msra.mxu0 %v808
        %1476 = vmatpush.msra.mxu0 %v804
        %1477 = vmatpush.msra.mxu0 %v800
        %1478 = vmatpush.msra.mxu0 %v796
        %1479 = vmatpush.msra.mxu0 %v792
        %1480 = vmatpush.msra.mxu0 %v788
        %1481 = vmatmul.f32.gmra.mxu0 %v777
        %v1482 = vpop.f32.mrf.mxu0
        %v1483 = vadd.f32 %v1280, %v1482
        %1484 = vmatmul.f32.gmra.mxu0 %v779
        %v1485 = vpop.f32.mrf.mxu0
        %v1486 = vadd.f32 %v1283, %v1485
        %1487 = vmatmul.f32.gmra.mxu0 %v781
        %v1488 = vpop.f32.mrf.mxu0
        %v1489 = vadd.f32 %v1286, %v1488
        %1490 = vmatmul.f32.gmra.mxu0 %v783
        %v1491 = vpop.f32.mrf.mxu0
        %v1492 = vadd.f32 %v1289, %v1491
        %1493 = vdwg.mxu0
        %1494 = vmatpush.msra.mxu0 %v912
        %1495 = vmatpush.msra.mxu0 %v908
        %1496 = vmatpush.msra.mxu0 %v904
        %1497 = vmatpush.msra.mxu0 %v900
        %1498 = vmatpush.msra.mxu0 %v896
        %1499 = vmatpush.msra.mxu0 %v892
        %1500 = vmatpush.msra.mxu0 %v888
        %1501 = vmatpush.msra.mxu0 %v884
        %1502 = vmatpush.msra.mxu0 %v880
        %1503 = vmatpush.msra.mxu0 %v876
        %1504 = vmatpush.msra.mxu0 %v872
        %1505 = vmatpush.msra.mxu0 %v868
        %1506 = vmatpush.msra.mxu0 %v864
        %1507 = vmatpush.msra.mxu0 %v860
        %1508 = vmatpush.msra.mxu0 %v856
        %1509 = vmatpush.msra.mxu0 %v852
        %1510 = vmatmul.f32.gmra.mxu0 %v778
        %v1511 = vpop.f32.mrf.mxu0
        %v1512 = vadd.f32 %v1483, %v1511
        %1513 = vmatmul.f32.gmra.mxu0 %v780
        %v1514 = vpop.f32.mrf.mxu0
        %v1515 = vadd.f32 %v1486, %v1514
        %1516 = vmatmul.f32.gmra.mxu0 %v782
        %v1517 = vpop.f32.mrf.mxu0
        %v1518 = vadd.f32 %v1489, %v1517
        %1519 = vmatmul.f32.gmra.mxu0 %v784
        %v1520 = vpop.f32.mrf.mxu0
        %v1521 = vadd.f32 %v1492, %v1520
        %1522 = vdwg.mxu0
        %1523 = vmatpush.msra.mxu0 %v849
        %1524 = vmatpush.msra.mxu0 %v845
        %1525 = vmatpush.msra.mxu0 %v841
        %1526 = vmatpush.msra.mxu0 %v837
        %1527 = vmatpush.msra.mxu0 %v833
        %1528 = vmatpush.msra.mxu0 %v829
        %1529 = vmatpush.msra.mxu0 %v825
        %1530 = vmatpush.msra.mxu0 %v821
        %1531 = vmatpush.msra.mxu0 %v817
        %1532 = vmatpush.msra.mxu0 %v813
        %1533 = vmatpush.msra.mxu0 %v809
        %1534 = vmatpush.msra.mxu0 %v805
        %1535 = vmatpush.msra.mxu0 %v801
        %1536 = vmatpush.msra.mxu0 %v797
        %1537 = vmatpush.msra.mxu0 %v793
        %1538 = vmatpush.msra.mxu0 %v789
        %1539 = vmatmul.f32.gmra.mxu0 %v777
        %v1540 = vpop.f32.mrf.mxu0
        %v1541 = vadd.f32 %v1338, %v1540
        %1542 = vmatmul.f32.gmra.mxu0 %v779
        %v1543 = vpop.f32.mrf.mxu0
        %v1544 = vadd.f32 %v1341, %v1543
        %1545 = vmatmul.f32.gmra.mxu0 %v781
        %v1546 = vpop.f32.mrf.mxu0
        %v1547 = vadd.f32 %v1344, %v1546
        %1548 = vmatmul.f32.gmra.mxu0 %v783
        %v1549 = vpop.f32.mrf.mxu0
        %v1550 = vadd.f32 %v1347, %v1549
        %1551 = vdwg.mxu0
        %1552 = vmatpush.msra.mxu0 %v913
        %1553 = vmatpush.msra.mxu0 %v909
        %1554 = vmatpush.msra.mxu0 %v905
        %1555 = vmatpush.msra.mxu0 %v901
        %1556 = vmatpush.msra.mxu0 %v897
        %1557 = vmatpush.msra.mxu0 %v893
        %1558 = vmatpush.msra.mxu0 %v889
        %1559 = vmatpush.msra.mxu0 %v885
        %1560 = vmatpush.msra.mxu0 %v881
        %1561 = vmatpush.msra.mxu0 %v877
        %1562 = vmatpush.msra.mxu0 %v873
        %1563 = vmatpush.msra.mxu0 %v869
        %1564 = vmatpush.msra.mxu0 %v865
        %1565 = vmatpush.msra.mxu0 %v861
        %1566 = vmatpush.msra.mxu0 %v857
        %1567 = vmatpush.msra.mxu0 %v853
        %1568 = vmatmul.f32.gmra.mxu0 %v778
        %v1569 = vpop.f32.mrf.mxu0
        %v1570 = vadd.f32 %v1541, %v1569
        %1571 = vmatmul.f32.gmra.mxu0 %v780
        %v1572 = vpop.f32.mrf.mxu0
        %v1573 = vadd.f32 %v1544, %v1572
        %1574 = vmatmul.f32.gmra.mxu0 %v782
        %v1575 = vpop.f32.mrf.mxu0
        %v1576 = vadd.f32 %v1547, %v1575
        %1577 = vmatmul.f32.gmra.mxu0 %v784
        %v1578 = vpop.f32.mrf.mxu0
        %v1579 = vadd.f32 %v1550, %v1578
        %1580 = vdwg.mxu0
        %s1581 = scalar_lea.vmem [#allocation7], 32
        %v1582 = vld [vmem:[%s1581] sm:$0xff]
        %v1583 = vld [vmem:[%s1581 + $0x8] sm:$0xff]
        %v1584 = vld [vmem:[%s1581 + $0x10] sm:$0xff]
        %v1585 = vld [vmem:[%s1581 + $0x18] sm:$0xff]
        %v1587 = vsel %vm918, %v1582, 0
        %v1590 = vsel %vm918, %v1583, 0
        %v1593 = vsel %vm918, %v1584, 0
        %v1596 = vsel %vm918, %v1585, 0
        %1598 = vmatpush.msra.mxu0 0.0
        %1599 = vmatpush.msra.mxu0 0.0
        %1600 = vmatpush.msra.mxu0 0.0
        %1601 = vmatpush.msra.mxu0 0.0
        %1602 = vmatpush.msra.mxu0 0.0
        %1603 = vmatpush.msra.mxu0 0.0
        %1604 = vmatpush.msra.mxu0 0.0
        %1605 = vmatpush.msra.mxu0 0.0
        %1606 = vmatpush.msra.mxu0 0.0
        %1607 = vmatpush.msra.mxu0 0.0
        %1608 = vmatpush.msra.mxu0 0.0
        %1609 = vmatpush.msra.mxu0 0.0
        %1610 = vmatpush.msra.mxu0 %v783
        %1611 = vmatpush.msra.mxu0 %v781
        %1612 = vmatpush.msra.mxu0 %v779
        %1613 = vmatpush.msra.mxu0 %v777
        %1614 = vmatmul.f32.gmra.mxu0 %v1587
        %v1615 = vpop.f32.mrf.mxu0
        %v1616 = vadd.f32 0.0, %v1615
        %1617 = vmatmul.f32.gmra.mxu0 %v1590
        %v1618 = vpop.f32.mrf.mxu0
        %v1619 = vadd.f32 0.0, %v1618
        %1620 = vmatmul.f32.gmra.mxu0 %v1593
        %v1621 = vpop.f32.mrf.mxu0
        %v1622 = vadd.f32 0.0, %v1621
        %1623 = vmatmul.f32.gmra.mxu0 %v1596
        %v1624 = vpop.f32.mrf.mxu0
        %v1625 = vadd.f32 0.0, %v1624
        %1626 = vdwg.mxu0
        %1627 = vmatpush.msra.mxu0 0.0
        %1628 = vmatpush.msra.mxu0 0.0
        %1629 = vmatpush.msra.mxu0 0.0
        %1630 = vmatpush.msra.mxu0 0.0
        %1631 = vmatpush.msra.mxu0 0.0
        %1632 = vmatpush.msra.mxu0 0.0
        %1633 = vmatpush.msra.mxu0 0.0
        %1634 = vmatpush.msra.mxu0 0.0
        %1635 = vmatpush.msra.mxu0 0.0
        %1636 = vmatpush.msra.mxu0 0.0
        %1637 = vmatpush.msra.mxu0 0.0
        %1638 = vmatpush.msra.mxu0 0.0
        %1639 = vmatpush.msra.mxu0 %v784
        %1640 = vmatpush.msra.mxu0 %v782
        %1641 = vmatpush.msra.mxu0 %v780
        %1642 = vmatpush.msra.mxu0 %v778
        %1643 = vmatmul.f32.gmra.mxu0 %v1587
        %v1644 = vpop.f32.mrf.mxu0
        %v1645 = vadd.f32 0.0, %v1644
        %1646 = vmatmul.f32.gmra.mxu0 %v1590
        %v1647 = vpop.f32.mrf.mxu0
        %v1648 = vadd.f32 0.0, %v1647
        %1649 = vmatmul.f32.gmra.mxu0 %v1593
        %v1650 = vpop.f32.mrf.mxu0
        %v1651 = vadd.f32 0.0, %v1650
        %1652 = vmatmul.f32.gmra.mxu0 %v1596
        %v1653 = vpop.f32.mrf.mxu0
        %v1654 = vadd.f32 0.0, %v1653
        %1655 = vdwg.mxu0
        %s1656 = scalar_lea.vmem [#allocation6], 2048
        %v1657 = vld [vmem:[%s1656] sm:$0xff]
        %v1658 = vld [vmem:[%s1656 + $0x8] sm:$0xff]
        %v1659 = vld [vmem:[%s1656 + $0x10] sm:$0xff]
        %v1660 = vld [vmem:[%s1656 + $0x18] sm:$0xff]
        %v1661 = vld [vmem:[%s1656 + $0x20] sm:$0xff]
        %v1662 = vld [vmem:[%s1656 + $0x28] sm:$0xff]
        %v1663 = vld [vmem:[%s1656 + $0x30] sm:$0xff]
        %v1664 = vld [vmem:[%s1656 + $0x38] sm:$0xff]
        %v1665 = vld [vmem:[%s1656 + $0x40] sm:$0xff]
        %v1666 = vld [vmem:[%s1656 + $0x48] sm:$0xff]
        %v1667 = vld [vmem:[%s1656 + $0x50] sm:$0xff]
        %v1668 = vld [vmem:[%s1656 + $0x58] sm:$0xff]
        %v1669 = vld [vmem:[%s1656 + $0x60] sm:$0xff]
        %v1670 = vld [vmem:[%s1656 + $0x68] sm:$0xff]
        %v1671 = vld [vmem:[%s1656 + $0x70] sm:$0xff]
        %v1672 = vld [vmem:[%s1656 + $0x78] sm:$0xff]
        %v1673 = vld [vmem:[%s1656 + $0x80] sm:$0xff]
        %v1674 = vld [vmem:[%s1656 + $0x88] sm:$0xff]
        %v1675 = vld [vmem:[%s1656 + $0x90] sm:$0xff]
        %v1676 = vld [vmem:[%s1656 + $0x98] sm:$0xff]
        %v1677 = vld [vmem:[%s1656 + $0xa0] sm:$0xff]
        %v1678 = vld [vmem:[%s1656 + $0xa8] sm:$0xff]
        %v1679 = vld [vmem:[%s1656 + $0xb0] sm:$0xff]
        %v1680 = vld [vmem:[%s1656 + $0xb8] sm:$0xff]
        %v1681 = vld [vmem:[%s1656 + $0xc0] sm:$0xff]
        %v1682 = vld [vmem:[%s1656 + $0xc8] sm:$0xff]
        %v1683 = vld [vmem:[%s1656 + $0xd0] sm:$0xff]
        %v1684 = vld [vmem:[%s1656 + $0xd8] sm:$0xff]
        %v1685 = vld [vmem:[%s1656 + $0xe0] sm:$0xff]
        %v1686 = vld [vmem:[%s1656 + $0xe8] sm:$0xff]
        %v1687 = vld [vmem:[%s1656 + $0xf0] sm:$0xff]
        %v1688 = vld [vmem:[%s1656 + $0xf8] sm:$0xff]
        %v1689 = vld [vmem:[%s1656 + $0x100] sm:$0xff]
        %v1690 = vld [vmem:[%s1656 + $0x108] sm:$0xff]
        %v1691 = vld [vmem:[%s1656 + $0x110] sm:$0xff]
        %v1692 = vld [vmem:[%s1656 + $0x118] sm:$0xff]
        %v1693 = vld [vmem:[%s1656 + $0x120] sm:$0xff]
        %v1694 = vld [vmem:[%s1656 + $0x128] sm:$0xff]
        %v1695 = vld [vmem:[%s1656 + $0x130] sm:$0xff]
        %v1696 = vld [vmem:[%s1656 + $0x138] sm:$0xff]
        %v1697 = vld [vmem:[%s1656 + $0x140] sm:$0xff]
        %v1698 = vld [vmem:[%s1656 + $0x148] sm:$0xff]
        %v1699 = vld [vmem:[%s1656 + $0x150] sm:$0xff]
        %v1700 = vld [vmem:[%s1656 + $0x158] sm:$0xff]
        %v1701 = vld [vmem:[%s1656 + $0x160] sm:$0xff]
        %v1702 = vld [vmem:[%s1656 + $0x168] sm:$0xff]
        %v1703 = vld [vmem:[%s1656 + $0x170] sm:$0xff]
        %v1704 = vld [vmem:[%s1656 + $0x178] sm:$0xff]
        %v1705 = vld [vmem:[%s1656 + $0x180] sm:$0xff]
        %v1706 = vld [vmem:[%s1656 + $0x188] sm:$0xff]
        %v1707 = vld [vmem:[%s1656 + $0x190] sm:$0xff]
        %v1708 = vld [vmem:[%s1656 + $0x198] sm:$0xff]
        %v1709 = vld [vmem:[%s1656 + $0x1a0] sm:$0xff]
        %v1710 = vld [vmem:[%s1656 + $0x1a8] sm:$0xff]
        %v1711 = vld [vmem:[%s1656 + $0x1b0] sm:$0xff]
        %v1712 = vld [vmem:[%s1656 + $0x1b8] sm:$0xff]
        %v1713 = vld [vmem:[%s1656 + $0x1c0] sm:$0xff]
        %v1714 = vld [vmem:[%s1656 + $0x1c8] sm:$0xff]
        %v1715 = vld [vmem:[%s1656 + $0x1d0] sm:$0xff]
        %v1716 = vld [vmem:[%s1656 + $0x1d8] sm:$0xff]
        %v1717 = vld [vmem:[%s1656 + $0x1e0] sm:$0xff]
        %v1718 = vld [vmem:[%s1656 + $0x1e8] sm:$0xff]
        %v1719 = vld [vmem:[%s1656 + $0x1f0] sm:$0xff]
        %v1720 = vld [vmem:[%s1656 + $0x1f8] sm:$0xff]
        %v1721 = vld [vmem:[%s1656 + $0x200] sm:$0xff]
        %v1722 = vld [vmem:[%s1656 + $0x208] sm:$0xff]
        %v1723 = vld [vmem:[%s1656 + $0x210] sm:$0xff]
        %v1724 = vld [vmem:[%s1656 + $0x218] sm:$0xff]
        %v1725 = vld [vmem:[%s1656 + $0x220] sm:$0xff]
        %v1726 = vld [vmem:[%s1656 + $0x228] sm:$0xff]
        %v1727 = vld [vmem:[%s1656 + $0x230] sm:$0xff]
        %v1728 = vld [vmem:[%s1656 + $0x238] sm:$0xff]
        %v1729 = vld [vmem:[%s1656 + $0x240] sm:$0xff]
        %v1730 = vld [vmem:[%s1656 + $0x248] sm:$0xff]
        %v1731 = vld [vmem:[%s1656 + $0x250] sm:$0xff]
        %v1732 = vld [vmem:[%s1656 + $0x258] sm:$0xff]
        %v1733 = vld [vmem:[%s1656 + $0x260] sm:$0xff]
        %v1734 = vld [vmem:[%s1656 + $0x268] sm:$0xff]
        %v1735 = vld [vmem:[%s1656 + $0x270] sm:$0xff]
        %v1736 = vld [vmem:[%s1656 + $0x278] sm:$0xff]
        %v1737 = vld [vmem:[%s1656 + $0x280] sm:$0xff]
        %v1738 = vld [vmem:[%s1656 + $0x288] sm:$0xff]
        %v1739 = vld [vmem:[%s1656 + $0x290] sm:$0xff]
        %v1740 = vld [vmem:[%s1656 + $0x298] sm:$0xff]
        %v1741 = vld [vmem:[%s1656 + $0x2a0] sm:$0xff]
        %v1742 = vld [vmem:[%s1656 + $0x2a8] sm:$0xff]
        %v1743 = vld [vmem:[%s1656 + $0x2b0] sm:$0xff]
        %v1744 = vld [vmem:[%s1656 + $0x2b8] sm:$0xff]
        %v1745 = vld [vmem:[%s1656 + $0x2c0] sm:$0xff]
        %v1746 = vld [vmem:[%s1656 + $0x2c8] sm:$0xff]
        %v1747 = vld [vmem:[%s1656 + $0x2d0] sm:$0xff]
        %v1748 = vld [vmem:[%s1656 + $0x2d8] sm:$0xff]
        %v1749 = vld [vmem:[%s1656 + $0x2e0] sm:$0xff]
        %v1750 = vld [vmem:[%s1656 + $0x2e8] sm:$0xff]
        %v1751 = vld [vmem:[%s1656 + $0x2f0] sm:$0xff]
        %v1752 = vld [vmem:[%s1656 + $0x2f8] sm:$0xff]
        %v1753 = vld [vmem:[%s1656 + $0x300] sm:$0xff]
        %v1754 = vld [vmem:[%s1656 + $0x308] sm:$0xff]
        %v1755 = vld [vmem:[%s1656 + $0x310] sm:$0xff]
        %v1756 = vld [vmem:[%s1656 + $0x318] sm:$0xff]
        %v1757 = vld [vmem:[%s1656 + $0x320] sm:$0xff]
        %v1758 = vld [vmem:[%s1656 + $0x328] sm:$0xff]
        %v1759 = vld [vmem:[%s1656 + $0x330] sm:$0xff]
        %v1760 = vld [vmem:[%s1656 + $0x338] sm:$0xff]
        %v1761 = vld [vmem:[%s1656 + $0x340] sm:$0xff]
        %v1762 = vld [vmem:[%s1656 + $0x348] sm:$0xff]
        %v1763 = vld [vmem:[%s1656 + $0x350] sm:$0xff]
        %v1764 = vld [vmem:[%s1656 + $0x358] sm:$0xff]
        %v1765 = vld [vmem:[%s1656 + $0x360] sm:$0xff]
        %v1766 = vld [vmem:[%s1656 + $0x368] sm:$0xff]
        %v1767 = vld [vmem:[%s1656 + $0x370] sm:$0xff]
        %v1768 = vld [vmem:[%s1656 + $0x378] sm:$0xff]
        %v1769 = vld [vmem:[%s1656 + $0x380] sm:$0xff]
        %v1770 = vld [vmem:[%s1656 + $0x388] sm:$0xff]
        %v1771 = vld [vmem:[%s1656 + $0x390] sm:$0xff]
        %v1772 = vld [vmem:[%s1656 + $0x398] sm:$0xff]
        %v1773 = vld [vmem:[%s1656 + $0x3a0] sm:$0xff]
        %v1774 = vld [vmem:[%s1656 + $0x3a8] sm:$0xff]
        %v1775 = vld [vmem:[%s1656 + $0x3b0] sm:$0xff]
        %v1776 = vld [vmem:[%s1656 + $0x3b8] sm:$0xff]
        %v1777 = vld [vmem:[%s1656 + $0x3c0] sm:$0xff]
        %v1778 = vld [vmem:[%s1656 + $0x3c8] sm:$0xff]
        %v1779 = vld [vmem:[%s1656 + $0x3d0] sm:$0xff]
        %v1780 = vld [vmem:[%s1656 + $0x3d8] sm:$0xff]
        %v1781 = vld [vmem:[%s1656 + $0x3e0] sm:$0xff]
        %v1782 = vld [vmem:[%s1656 + $0x3e8] sm:$0xff]
        %v1783 = vld [vmem:[%s1656 + $0x3f0] sm:$0xff]
        %v1784 = vld [vmem:[%s1656 + $0x3f8] sm:$0xff]
        %1785 = vmatpush.msra.mxu0 %v1717
        %1786 = vmatpush.msra.mxu0 %v1713
        %1787 = vmatpush.msra.mxu0 %v1709
        %1788 = vmatpush.msra.mxu0 %v1705
        %1789 = vmatpush.msra.mxu0 %v1701
        %1790 = vmatpush.msra.mxu0 %v1697
        %1791 = vmatpush.msra.mxu0 %v1693
        %1792 = vmatpush.msra.mxu0 %v1689
        %1793 = vmatpush.msra.mxu0 %v1685
        %1794 = vmatpush.msra.mxu0 %v1681
        %1795 = vmatpush.msra.mxu0 %v1677
        %1796 = vmatpush.msra.mxu0 %v1673
        %1797 = vmatpush.msra.mxu0 %v1669
        %1798 = vmatpush.msra.mxu0 %v1665
        %1799 = vmatpush.msra.mxu0 %v1661
        %1800 = vmatpush.msra.mxu0 %v1657
        %1801 = vmatmul.f32.gmra.mxu0 %v1616
        %v1802 = vpop.f32.mrf.mxu0
        %v1803 = vadd.f32 0.0, %v1802
        %1804 = vmatmul.f32.gmra.mxu0 %v1619
        %v1805 = vpop.f32.mrf.mxu0
        %v1806 = vadd.f32 0.0, %v1805
        %1807 = vmatmul.f32.gmra.mxu0 %v1622
        %v1808 = vpop.f32.mrf.mxu0
        %v1809 = vadd.f32 0.0, %v1808
        %1810 = vmatmul.f32.gmra.mxu0 %v1625
        %v1811 = vpop.f32.mrf.mxu0
        %v1812 = vadd.f32 0.0, %v1811
        %1813 = vdwg.mxu0
        %1814 = vmatpush.msra.mxu0 %v1781
        %1815 = vmatpush.msra.mxu0 %v1777
        %1816 = vmatpush.msra.mxu0 %v1773
        %1817 = vmatpush.msra.mxu0 %v1769
        %1818 = vmatpush.msra.mxu0 %v1765
        %1819 = vmatpush.msra.mxu0 %v1761
        %1820 = vmatpush.msra.mxu0 %v1757
        %1821 = vmatpush.msra.mxu0 %v1753
        %1822 = vmatpush.msra.mxu0 %v1749
        %1823 = vmatpush.msra.mxu0 %v1745
        %1824 = vmatpush.msra.mxu0 %v1741
        %1825 = vmatpush.msra.mxu0 %v1737
        %1826 = vmatpush.msra.mxu0 %v1733
        %1827 = vmatpush.msra.mxu0 %v1729
        %1828 = vmatpush.msra.mxu0 %v1725
        %1829 = vmatpush.msra.mxu0 %v1721
        %1830 = vmatmul.f32.gmra.mxu0 %v1645
        %v1831 = vpop.f32.mrf.mxu0
        %v1832 = vadd.f32 %v1803, %v1831
        %1833 = vmatmul.f32.gmra.mxu0 %v1648
        %v1834 = vpop.f32.mrf.mxu0
        %v1835 = vadd.f32 %v1806, %v1834
        %1836 = vmatmul.f32.gmra.mxu0 %v1651
        %v1837 = vpop.f32.mrf.mxu0
        %v1838 = vadd.f32 %v1809, %v1837
        %1839 = vmatmul.f32.gmra.mxu0 %v1654
        %v1840 = vpop.f32.mrf.mxu0
        %v1841 = vadd.f32 %v1812, %v1840
        %1842 = vdwg.mxu0
        %1843 = vmatpush.msra.mxu0 %v1718
        %1844 = vmatpush.msra.mxu0 %v1714
        %1845 = vmatpush.msra.mxu0 %v1710
        %1846 = vmatpush.msra.mxu0 %v1706
        %1847 = vmatpush.msra.mxu0 %v1702
        %1848 = vmatpush.msra.mxu0 %v1698
        %1849 = vmatpush.msra.mxu0 %v1694
        %1850 = vmatpush.msra.mxu0 %v1690
        %1851 = vmatpush.msra.mxu0 %v1686
        %1852 = vmatpush.msra.mxu0 %v1682
        %1853 = vmatpush.msra.mxu0 %v1678
        %1854 = vmatpush.msra.mxu0 %v1674
        %1855 = vmatpush.msra.mxu0 %v1670
        %1856 = vmatpush.msra.mxu0 %v1666
        %1857 = vmatpush.msra.mxu0 %v1662
        %1858 = vmatpush.msra.mxu0 %v1658
        %1859 = vmatmul.f32.gmra.mxu0 %v1616
        %v1860 = vpop.f32.mrf.mxu0
        %v1861 = vadd.f32 0.0, %v1860
        %1862 = vmatmul.f32.gmra.mxu0 %v1619
        %v1863 = vpop.f32.mrf.mxu0
        %v1864 = vadd.f32 0.0, %v1863
        %1865 = vmatmul.f32.gmra.mxu0 %v1622
        %v1866 = vpop.f32.mrf.mxu0
        %v1867 = vadd.f32 0.0, %v1866
        %1868 = vmatmul.f32.gmra.mxu0 %v1625
        %v1869 = vpop.f32.mrf.mxu0
        %v1870 = vadd.f32 0.0, %v1869
        %1871 = vdwg.mxu0
        %1872 = vmatpush.msra.mxu0 %v1782
        %1873 = vmatpush.msra.mxu0 %v1778
        %1874 = vmatpush.msra.mxu0 %v1774
        %1875 = vmatpush.msra.mxu0 %v1770
        %1876 = vmatpush.msra.mxu0 %v1766
        %1877 = vmatpush.msra.mxu0 %v1762
        %1878 = vmatpush.msra.mxu0 %v1758
        %1879 = vmatpush.msra.mxu0 %v1754
        %1880 = vmatpush.msra.mxu0 %v1750
        %1881 = vmatpush.msra.mxu0 %v1746
        %1882 = vmatpush.msra.mxu0 %v1742
        %1883 = vmatpush.msra.mxu0 %v1738
        %1884 = vmatpush.msra.mxu0 %v1734
        %1885 = vmatpush.msra.mxu0 %v1730
        %1886 = vmatpush.msra.mxu0 %v1726
        %1887 = vmatpush.msra.mxu0 %v1722
        %1888 = vmatmul.f32.gmra.mxu0 %v1645
        %v1889 = vpop.f32.mrf.mxu0
        %v1890 = vadd.f32 %v1861, %v1889
        %1891 = vmatmul.f32.gmra.mxu0 %v1648
        %v1892 = vpop.f32.mrf.mxu0
        %v1893 = vadd.f32 %v1864, %v1892
        %1894 = vmatmul.f32.gmra.mxu0 %v1651
        %v1895 = vpop.f32.mrf.mxu0
        %v1896 = vadd.f32 %v1867, %v1895
        %1897 = vmatmul.f32.gmra.mxu0 %v1654
        %v1898 = vpop.f32.mrf.mxu0
        %v1899 = vadd.f32 %v1870, %v1898
        %1900 = vdwg.mxu0
        %1901 = vmatpush.msra.mxu0 %v1719
        %1902 = vmatpush.msra.mxu0 %v1715
        %1903 = vmatpush.msra.mxu0 %v1711
        %1904 = vmatpush.msra.mxu0 %v1707
        %1905 = vmatpush.msra.mxu0 %v1703
        %1906 = vmatpush.msra.mxu0 %v1699
        %1907 = vmatpush.msra.mxu0 %v1695
        %1908 = vmatpush.msra.mxu0 %v1691
        %1909 = vmatpush.msra.mxu0 %v1687
        %1910 = vmatpush.msra.mxu0 %v1683
        %1911 = vmatpush.msra.mxu0 %v1679
        %1912 = vmatpush.msra.mxu0 %v1675
        %1913 = vmatpush.msra.mxu0 %v1671
        %1914 = vmatpush.msra.mxu0 %v1667
        %1915 = vmatpush.msra.mxu0 %v1663
        %1916 = vmatpush.msra.mxu0 %v1659
        %1917 = vmatmul.f32.gmra.mxu0 %v1616
        %v1918 = vpop.f32.mrf.mxu0
        %v1919 = vadd.f32 0.0, %v1918
        %1920 = vmatmul.f32.gmra.mxu0 %v1619
        %v1921 = vpop.f32.mrf.mxu0
        %v1922 = vadd.f32 0.0, %v1921
        %1923 = vmatmul.f32.gmra.mxu0 %v1622
        %v1924 = vpop.f32.mrf.mxu0
        %v1925 = vadd.f32 0.0, %v1924
        %1926 = vmatmul.f32.gmra.mxu0 %v1625
        %v1927 = vpop.f32.mrf.mxu0
        %v1928 = vadd.f32 0.0, %v1927
        %1929 = vdwg.mxu0
        %1930 = vmatpush.msra.mxu0 %v1783
        %1931 = vmatpush.msra.mxu0 %v1779
        %1932 = vmatpush.msra.mxu0 %v1775
        %1933 = vmatpush.msra.mxu0 %v1771
        %1934 = vmatpush.msra.mxu0 %v1767
        %1935 = vmatpush.msra.mxu0 %v1763
        %1936 = vmatpush.msra.mxu0 %v1759
        %1937 = vmatpush.msra.mxu0 %v1755
        %1938 = vmatpush.msra.mxu0 %v1751
        %1939 = vmatpush.msra.mxu0 %v1747
        %1940 = vmatpush.msra.mxu0 %v1743
        %1941 = vmatpush.msra.mxu0 %v1739
        %1942 = vmatpush.msra.mxu0 %v1735
        %1943 = vmatpush.msra.mxu0 %v1731
        %1944 = vmatpush.msra.mxu0 %v1727
        %1945 = vmatpush.msra.mxu0 %v1723
        %1946 = vmatmul.f32.gmra.mxu0 %v1645
        %v1947 = vpop.f32.mrf.mxu0
        %v1948 = vadd.f32 %v1919, %v1947
        %1949 = vmatmul.f32.gmra.mxu0 %v1648
        %v1950 = vpop.f32.mrf.mxu0
        %v1951 = vadd.f32 %v1922, %v1950
        %1952 = vmatmul.f32.gmra.mxu0 %v1651
        %v1953 = vpop.f32.mrf.mxu0
        %v1954 = vadd.f32 %v1925, %v1953
        %1955 = vmatmul.f32.gmra.mxu0 %v1654
        %v1956 = vpop.f32.mrf.mxu0
        %v1957 = vadd.f32 %v1928, %v1956
        %1958 = vdwg.mxu0
        %1959 = vmatpush.msra.mxu0 %v1720
        %1960 = vmatpush.msra.mxu0 %v1716
        %1961 = vmatpush.msra.mxu0 %v1712
        %1962 = vmatpush.msra.mxu0 %v1708
        %1963 = vmatpush.msra.mxu0 %v1704
        %1964 = vmatpush.msra.mxu0 %v1700
        %1965 = vmatpush.msra.mxu0 %v1696
        %1966 = vmatpush.msra.mxu0 %v1692
        %1967 = vmatpush.msra.mxu0 %v1688
        %1968 = vmatpush.msra.mxu0 %v1684
        %1969 = vmatpush.msra.mxu0 %v1680
        %1970 = vmatpush.msra.mxu0 %v1676
        %1971 = vmatpush.msra.mxu0 %v1672
        %1972 = vmatpush.msra.mxu0 %v1668
        %1973 = vmatpush.msra.mxu0 %v1664
        %1974 = vmatpush.msra.mxu0 %v1660
        %1975 = vmatmul.f32.gmra.mxu0 %v1616
        %v1976 = vpop.f32.mrf.mxu0
        %v1977 = vadd.f32 0.0, %v1976
        %1978 = vmatmul.f32.gmra.mxu0 %v1619
        %v1979 = vpop.f32.mrf.mxu0
        %v1980 = vadd.f32 0.0, %v1979
        %1981 = vmatmul.f32.gmra.mxu0 %v1622
        %v1982 = vpop.f32.mrf.mxu0
        %v1983 = vadd.f32 0.0, %v1982
        %1984 = vmatmul.f32.gmra.mxu0 %v1625
        %v1985 = vpop.f32.mrf.mxu0
        %v1986 = vadd.f32 0.0, %v1985
        %1987 = vdwg.mxu0
        %1988 = vmatpush.msra.mxu0 %v1784
        %1989 = vmatpush.msra.mxu0 %v1780
        %1990 = vmatpush.msra.mxu0 %v1776
        %1991 = vmatpush.msra.mxu0 %v1772
        %1992 = vmatpush.msra.mxu0 %v1768
        %1993 = vmatpush.msra.mxu0 %v1764
        %1994 = vmatpush.msra.mxu0 %v1760
        %1995 = vmatpush.msra.mxu0 %v1756
        %1996 = vmatpush.msra.mxu0 %v1752
        %1997 = vmatpush.msra.mxu0 %v1748
        %1998 = vmatpush.msra.mxu0 %v1744
        %1999 = vmatpush.msra.mxu0 %v1740
        %2000 = vmatpush.msra.mxu0 %v1736
        %2001 = vmatpush.msra.mxu0 %v1732
        %2002 = vmatpush.msra.mxu0 %v1728
        %2003 = vmatpush.msra.mxu0 %v1724
        %2004 = vmatmul.f32.gmra.mxu0 %v1645
        %v2005 = vpop.f32.mrf.mxu0
        %v2006 = vadd.f32 %v1977, %v2005
        %2007 = vmatmul.f32.gmra.mxu0 %v1648
        %v2008 = vpop.f32.mrf.mxu0
        %v2009 = vadd.f32 %v1980, %v2008
        %2010 = vmatmul.f32.gmra.mxu0 %v1651
        %v2011 = vpop.f32.mrf.mxu0
        %v2012 = vadd.f32 %v1983, %v2011
        %2013 = vmatmul.f32.gmra.mxu0 %v1654
        %v2014 = vpop.f32.mrf.mxu0
        %v2015 = vadd.f32 %v1986, %v2014
        %2016 = vdwg.mxu0
        %v2017 = vadd.f32 %v1396, %v1832
        %v2018 = vadd.f32 %v1454, %v1890
        %v2019 = vadd.f32 %v1512, %v1948
        %v2020 = vadd.f32 %v1570, %v2006
        %v2021 = vadd.f32 %v1399, %v1835
        %v2022 = vadd.f32 %v1457, %v1893
        %v2023 = vadd.f32 %v1515, %v1951
        %v2024 = vadd.f32 %v1573, %v2009
        %v2025 = vadd.f32 %v1402, %v1838
        %v2026 = vadd.f32 %v1460, %v1896
        %v2027 = vadd.f32 %v1518, %v1954
        %v2028 = vadd.f32 %v1576, %v2012
        %v2029 = vadd.f32 %v1405, %v1841
        %v2030 = vadd.f32 %v1463, %v1899
        %v2031 = vadd.f32 %v1521, %v1957
        %v2032 = vadd.f32 %v1579, %v2015
        %v2033 = vmax.f32 %v2017, 0.0
        %v2034 = vmax.f32 %v2018, 0.0
        %v2035 = vmax.f32 %v2019, 0.0
        %v2036 = vmax.f32 %v2020, 0.0
        %v2037 = vmax.f32 %v2021, 0.0
        %v2038 = vmax.f32 %v2022, 0.0
        %v2039 = vmax.f32 %v2023, 0.0
        %v2040 = vmax.f32 %v2024, 0.0
        %v2041 = vmax.f32 %v2025, 0.0
        %v2042 = vmax.f32 %v2026, 0.0
        %v2043 = vmax.f32 %v2027, 0.0
        %v2044 = vmax.f32 %v2028, 0.0
        %v2045 = vmax.f32 %v2029, 0.0
        %v2046 = vmax.f32 %v2030, 0.0
        %v2047 = vmax.f32 %v2031, 0.0
        %v2048 = vmax.f32 %v2032, 0.0
        %2049 = vst [vmem:[%s318] sm:$0xff] %v2033
        %2050 = vst [vmem:[%s318 + $0x8] sm:$0xff] %v2034
        %2051 = vst [vmem:[%s318 + $0x10] sm:$0xff] %v2035
        %2052 = vst [vmem:[%s318 + $0x18] sm:$0xff] %v2036
        %2053 = vst [vmem:[%s318 + $0x20] sm:$0xff] %v2037
        %2054 = vst [vmem:[%s318 + $0x28] sm:$0xff] %v2038
        %2055 = vst [vmem:[%s318 + $0x30] sm:$0xff] %v2039
        %2056 = vst [vmem:[%s318 + $0x38] sm:$0xff] %v2040
        %2057 = vst [vmem:[%s318 + $0x40] sm:$0xff] %v2041
        %2058 = vst [vmem:[%s318 + $0x48] sm:$0xff] %v2042
        %2059 = vst [vmem:[%s318 + $0x50] sm:$0xff] %v2043
        %2060 = vst [vmem:[%s318 + $0x58] sm:$0xff] %v2044
        %2061 = vst [vmem:[%s318 + $0x60] sm:$0xff] %v2045
        %2062 = vst [vmem:[%s318 + $0x68] sm:$0xff] %v2046
        %2063 = vst [vmem:[%s318 + $0x70] sm:$0xff] %v2047
        %2064 = vst [vmem:[%s318 + $0x78] sm:$0xff] %v2048
        %p2065 = scmp.lt.s32.totalorder %s20, 1
        %s2066 = scalar_select %p2065, %s20, 1
        %s2067 = smul.addr %s2066, 16
        %s2068 = smul.addr %s2067, 8
        %s2069 = scalar_lea.vmem %s6, %s2068
        // Predicated region
        $region61: #{decoder_se_block_v3.1} parent=43 // pred_check
          %p2070 = pneg %p169
        $region62: #{decoder_se_block_v3.1} parent=43 // pred_check_branch
          %2072 = sbr.rel (%p2070) target = $region64
        $region63: #{decoder_se_block_v3.1} parent=43 // pred_region
          _
        $region64: #{decoder_se_block_v3.1} parent=43 // pred_fallthru
          _
      $region44: #{decoder_se_block_v3.1} parent=5 // pred_fallthru
        _
      %p2073 = scmp.le.s32.totalorder 2, %s15
      // Predicated region
      $region65: #{decoder_se_block_v3.1} parent=5 // pred_check
        %p2074 = pneg %p2073
      $region66: #{decoder_se_block_v3.1} parent=5 // pred_check_branch
        %2076 = sbr.rel (%p2074) target = $region68
      $region67: #{decoder_se_block_v3.1} parent=5 // pred_region
        %s2077 = ssub.s32 %s15, 2
        // Predicated region
        $region69: #{decoder_se_block_v3.1} parent=67 // pred_check
          %p2078 = pneg %p175
        $region70: #{decoder_se_block_v3.1} parent=67 // pred_check_branch
          %2080 = sbr.rel (%p2078) target = $region72
        $region71: #{decoder_se_block_v3.1} parent=67 // pred_region
          %p2081 = scmp.lt.s32.totalorder %s21, 1
          %s2082 = scalar_select %p2081, %s21, 1
          %s2083 = smul.addr %s2082, 16
          %s2084 = smul.addr %s2083, 8
          %s2085 = scalar_lea.vmem %s6, %s2084
        $region72: #{decoder_se_block_v3.1} parent=67 // pred_fallthru
          _
      $region68: #{decoder_se_block_v3.1} parent=5 // pred_fallthru
        _
    $region6: #{decoder_se_block_v3.1} parent=1 // loop_footer
      %s19 = sadd.s32 1, %s15
    $region7: #{decoder_se_block_v3.1} parent=1 // loop_footer_branch
      %14 = sbr.rel target = $region3
    $region8: #{decoder_se_block_v3.1} parent=1 // loop_exit
      _
    %2086 = vsyncpa [#allocation3], 1
    %s2087 = scalar_lea.sflag [#allocation3], 1
    %2088 = vsyncpa %s2087, 1
    %2089 = vsyncpa [#allocation5], 1
    %2090 = vsyncpa [#allocation8], 1

</llo_original>
